<compile_context>
chip_gen: v7x
topology: tpu7x:2x2x1
jax: 0.10.0
libtpu: 0.0.40
codegen_flags: <defaults>
</compile_context>

<pallas_src>
import jax
import jax.numpy as jnp
from jax import lax
from jax.experimental import pallas as pl
from jax.experimental.pallas import tpu as pltpu


def _round_up(x, m):
    return (x + m - 1) // m * m


def _prelu(v, a):
    return jnp.where(v >= 0, v, a * v)


def ffp_kernel(alphas_ref, x_ref,
               w0, b0, w1, b1, w2, b2, w3, b3, w4, b4,
               o_ref):
    T, TM, Cin = x_ref.shape
    # Hoist the PReLU slopes (scalar SMEM reads) once for all layers.
    a0 = alphas_ref[0]
    a1 = alphas_ref[1]
    a2 = alphas_ref[2]
    a3 = alphas_ref[3]
    a4 = alphas_ref[4]

    # (T, TM, C) -> (T*TM, C): time folded into the matmul M dimension.
    h = x_ref[...].reshape(T * TM, Cin)                       # bf16

    def conv3_prelu(hb, w_ref, b_ref, alpha):
        # Conv2d(kernel=(3,1), padding=(1,0)) + PReLU over all T steps at once.
        # Tap kk contributes x[t+kk-1] @ w[kk]; with time flattened each tap is
        # one full-height matmul accumulated into time-shifted row ranges.
        H = w_ref.shape[-1]
        y = jnp.dot(hb, w_ref[1], preferred_element_type=jnp.float32)
        y = y + b_ref[...]
        up = jnp.dot(hb[:(T - 1) * TM], w_ref[0],
                     preferred_element_type=jnp.float32)      # -> rows TM..T*TM
        dn = jnp.dot(hb[TM:], w_ref[2],
                     preferred_element_type=jnp.float32)      # -> rows 0..(T-1)*TM
        z = jnp.zeros((TM, H), jnp.float32)
        y = y + jnp.concatenate([z, up], axis=0)
        y = y + jnp.concatenate([dn, z], axis=0)
        return _prelu(y, alpha)

    for w_ref, b_ref, alpha in ((w0, b0, a0), (w1, b1, a1),
                                (w2, b2, a2), (w3, b3, a3)):
        h = conv3_prelu(h, w_ref, b_ref, alpha).astype(jnp.bfloat16)

    # Final Conv2d(kernel=(T,1), padding=0): collapses T -> 1.
    Cout = w4.shape[-1]
    acc = jnp.zeros((TM, Cout), jnp.float32)
    for t in range(T):
        acc = acc + jnp.dot(h[t * TM:(t + 1) * TM], w4[t],
                            preferred_element_type=jnp.float32)
    acc = acc + b4[...]
    # outer self.activation PReLU
    o_ref[...] = _prelu(acc, a4)


def ffp_pallas(x, params, *, tile_m=256):
    alphas, (w0, b0), (w1, b1), (w2, b2), (w3, b3), (w4, b4) = params
    B, P, T, N, C = x.shape
    M = B * P * N
    H = w0.shape[-1]
    Cout = w4.shape[-1]

    # (B,P,T,N,C) -> (T, B*P*N, C); row order (B,P,N) matches PyTorch's
    # permute(0,1,3,4,2).view(B*P*N, C, T, 1) row order.
    xk = jnp.transpose(x, (2, 0, 1, 3, 4)).reshape(T, M, C)

    # Tile sizing: large tiles amortize per-step overhead and fill the MXU.
    # tm is kept a multiple of 16 (bf16 sublane tile); M is zero-padded so the
    # grid divides evenly, the pad rows are sliced off afterwards.
    tm = min(_round_up(int(tile_m), 16), _round_up(M, 16))
    Mp = _round_up(M, tm)
    if Mp != M:
        xk = jnp.pad(xk, ((0, 0), (0, Mp - M), (0, 0)))

    # bf16 matmul operands (f32 accumulation inside the kernel); biases f32.
    xk = xk.astype(jnp.bfloat16)
    w0b, w1b, w2b, w3b, w4b = (w.astype(jnp.bfloat16)
                               for w in (w0, w1, w2, w3, w4))

    full3 = lambda i: (0, 0, 0)
    full2 = lambda i: (0, 0)

    out = pl.pallas_call(
        ffp_kernel,
        out_shape=jax.ShapeDtypeStruct((Mp, Cout), jnp.float32),
        grid=(Mp // tm,),
        in_specs=[
            pl.BlockSpec(memory_space=pltpu.MemorySpace.SMEM),    # alphas (5,)
            pl.BlockSpec((T, tm, C), lambda i: (0, i, 0)),        # x tile
            pl.BlockSpec((3, C, H), full3), pl.BlockSpec((1, H), full2),
            pl.BlockSpec((3, H, H), full3), pl.BlockSpec((1, H), full2),
            pl.BlockSpec((3, H, H), full3), pl.BlockSpec((1, H), full2),
            pl.BlockSpec((3, H, H), full3), pl.BlockSpec((1, H), full2),
            pl.BlockSpec((T, H, Cout), full3), pl.BlockSpec((1, Cout), full2),
        ],
        out_specs=pl.BlockSpec((tm, Cout), lambda i: (i, 0)),
        compiler_params=pltpu.CompilerParams(
            dimension_semantics=("parallel",)),
    )(alphas, xk, w0b, b0, w1b, b1, w2b, b2, w3b, b3, w4b, b4)

    # view(B, P, N, out_channels).unsqueeze(2)
    return out[:M].reshape(B, P, N, Cout)[:, :, None, :, :]


def ffp_reference(x, params):
    """Pure-JAX f32 reference using lax.conv in NCHW/OIHW, mirroring PyTorch."""
    alphas, *convs = params
    B, P, T, N, C = x.shape
    M = B * P * N
    h = jnp.transpose(x, (0, 1, 3, 4, 2)).reshape(M, C, T, 1)     # NCHW
    dn = ('NCHW', 'OIHW', 'NCHW')
    for li in range(4):
        w, b = convs[li]                                          # (3,Cin,H),(1,H)
        w_oihw = jnp.transpose(w, (2, 1, 0))[..., None]           # (H,Cin,3,1)
        h = lax.conv_general_dilated(h, w_oihw, (1, 1),
                                     padding=((1, 1), (0, 0)),
                                     dimension_numbers=dn)
        h = h + b.reshape(1, -1, 1, 1)
        h = _prelu(h, alphas[li])
    w, b = convs[4]                                               # (T,H,Cout),(1,Cout)
    w_oihw = jnp.transpose(w, (2, 1, 0))[..., None]               # (Cout,H,T,1)
    h = lax.conv_general_dilated(h, w_oihw, (1, 1),
                                 padding=((0, 0), (0, 0)),
                                 dimension_numbers=dn)
    h = h + b.reshape(1, -1, 1, 1)
    h = _prelu(h, alphas[4])
    Cout = w.shape[-1]
    return h.reshape(B, P, N, Cout)[:, :, None, :, :]


if __name__ == "__main__":
    # Small shapes consistent with the module: T_inp must equal input_frames
    # for the final .view() to be valid (final conv collapses time to 1).
    B, P, N = 2, 3, 8
    in_channels, hidden, out_channels = 4, 32, 16
    T = input_frames = 4

    key = jax.random.PRNGKey(0)
    ks = jax.random.split(key, 12)

    def winit(k, shape, fan_in):
        return jax.random.normal(k, shape, jnp.float32) / jnp.sqrt(float(fan_in))

    w0 = winit(ks[0], (3, in_channels, hidden), 3 * in_channels)
    b0 = 0.01 * jax.random.normal(ks[1], (1, hidden), jnp.float32)
    w1 = winit(ks[2], (3, hidden, hidden), 3 * hidden)
    b1 = 0.01 * jax.random.normal(ks[3], (1, hidden), jnp.float32)
    w2 = winit(ks[4], (3, hidden, hidden), 3 * hidden)
    b2 = 0.01 * jax.random.normal(ks[5], (1, hidden), jnp.float32)
    w3 = winit(ks[6], (3, hidden, hidden), 3 * hidden)
    b3 = 0.01 * jax.random.normal(ks[7], (1, hidden), jnp.float32)
    w4 = winit(ks[8], (T, hidden, out_channels), T * hidden)
    b4 = 0.01 * jax.random.normal(ks[9], (1, out_channels), jnp.float32)

    # PyTorch nn.PReLU() default: single slope 0.25 (4 inner + 1 outer).
    alphas = jnp.full((5,), 0.25, jnp.float32)

    x = jax.random.normal(ks[10], (B, P, T, N, in_channels), jnp.float32)

    params = (alphas, (w0, b0), (w1, b1), (w2, b2), (w3, b3), (w4, b4))

    out = ffp_pallas(x, params)
    out = jax.block_until_ready(out)

    ref = ffp_reference(x, params)
    assert out.shape == (B, P, 1, N, out_channels), out.shape
    # bf16 MXU operands with f32 accumulation -> a few percent tolerance.
    assert jnp.allclose(out, ref, atol=3e-2, rtol=3e-2), \
        float(jnp.max(jnp.abs(out - ref)))

    print("KERNEL_OK")
</pallas_src>

<mosaic_0001>
module attributes {stable_mosaic.version = 11 : i64} {
  func.func @ffp_kernel(%arg0: i32, %arg1: memref<5xf32, #tpu.memory_space<smem>>, %arg2: memref<4x48x4xbf16, #tpu.memory_space<vmem>>, %arg3: memref<3x4x32xbf16, #tpu.memory_space<vmem>>, %arg4: memref<1x32xf32, #tpu.memory_space<vmem>>, %arg5: memref<3x32x32xbf16, #tpu.memory_space<vmem>>, %arg6: memref<1x32xf32, #tpu.memory_space<vmem>>, %arg7: memref<3x32x32xbf16, #tpu.memory_space<vmem>>, %arg8: memref<1x32xf32, #tpu.memory_space<vmem>>, %arg9: memref<3x32x32xbf16, #tpu.memory_space<vmem>>, %arg10: memref<1x32xf32, #tpu.memory_space<vmem>>, %arg11: memref<4x32x16xbf16, #tpu.memory_space<vmem>>, %arg12: memref<1x16xf32, #tpu.memory_space<vmem>>, %arg13: memref<48x16xf32, #tpu.memory_space<vmem>>) attributes {dimension_semantics = [#tpu.dimension_semantics<parallel>], iteration_bounds = array<i64: 1>, scalar_prefetch = 0 : i64, scratch_operands = 0 : i64, tpu.core_type = #tpu.core_type<tc>, window_params = [{transform_indices = @transform_0, window_bounds = array<i64: 5>}, {transform_indices = @transform_1, window_bounds = array<i64: 4, 48, 4>}, {pipeline_mode = #tpu.pipeline_mode<synchronous>, transform_indices = @transform_2, window_bounds = array<i64: 3, 4, 32>}, {pipeline_mode = #tpu.pipeline_mode<synchronous>, transform_indices = @transform_3, window_bounds = array<i64: 1, 32>}, {pipeline_mode = #tpu.pipeline_mode<synchronous>, transform_indices = @transform_4, window_bounds = array<i64: 3, 32, 32>}, {pipeline_mode = #tpu.pipeline_mode<synchronous>, transform_indices = @transform_5, window_bounds = array<i64: 1, 32>}, {pipeline_mode = #tpu.pipeline_mode<synchronous>, transform_indices = @transform_6, window_bounds = array<i64: 3, 32, 32>}, {pipeline_mode = #tpu.pipeline_mode<synchronous>, transform_indices = @transform_7, window_bounds = array<i64: 1, 32>}, {pipeline_mode = #tpu.pipeline_mode<synchronous>, transform_indices = @transform_8, window_bounds = array<i64: 3, 32, 32>}, {pipeline_mode = #tpu.pipeline_mode<synchronous>, transform_indices = @transform_9, window_bounds = array<i64: 1, 32>}, {pipeline_mode = #tpu.pipeline_mode<synchronous>, transform_indices = @transform_10, window_bounds = array<i64: 4, 32, 16>}, {pipeline_mode = #tpu.pipeline_mode<synchronous>, transform_indices = @transform_11, window_bounds = array<i64: 1, 16>}, {transform_indices = @transform_12, window_bounds = array<i64: 48, 16>}]} {
    %c0 = arith.constant 0 : index
    %0 = memref.load %arg1[%c0] : memref<5xf32, #tpu.memory_space<smem>>
    %c1 = arith.constant 1 : index
    %1 = memref.load %arg1[%c1] : memref<5xf32, #tpu.memory_space<smem>>
    %c2 = arith.constant 2 : index
    %2 = memref.load %arg1[%c2] : memref<5xf32, #tpu.memory_space<smem>>
    %c3 = arith.constant 3 : index
    %3 = memref.load %arg1[%c3] : memref<5xf32, #tpu.memory_space<smem>>
    %c4 = arith.constant 4 : index
    %4 = memref.load %arg1[%c4] : memref<5xf32, #tpu.memory_space<smem>>
    %c0_0 = arith.constant 0 : index
    %c0_1 = arith.constant 0 : index
    %c0_2 = arith.constant 0 : index
    %5 = vector.load %arg2[%c0_0, %c0_1, %c0_2] : memref<4x48x4xbf16, #tpu.memory_space<vmem>>, vector<4x48x4xbf16>
    %6 = vector.shape_cast %5 : vector<4x48x4xbf16> to vector<192x4xbf16>
    %c1_3 = arith.constant 1 : index
    %c0_4 = arith.constant 0 : index
    %c0_5 = arith.constant 0 : index
    %7 = vector.load %arg3[%c1_3, %c0_4, %c0_5] : memref<3x4x32xbf16, #tpu.memory_space<vmem>>, vector<1x4x32xbf16>
    %8 = vector.shape_cast %7 : vector<1x4x32xbf16> to vector<4x32xbf16>
    %cst = arith.constant dense<0.000000e+00> : vector<192x32xf32>
    %9 = tpu.matmul %6, %8, %cst {dimension_numbers = #tpu.dot_dimension_numbers<[1], [0], [0], [1], [0, 0, 1, 1], [], []>} : vector<192x4xbf16>, vector<4x32xbf16>, vector<192x32xf32> -> vector<192x32xf32>
    %c0_6 = arith.constant 0 : index
    %c0_7 = arith.constant 0 : index
    %10 = vector.load %arg4[%c0_6, %c0_7] : memref<1x32xf32, #tpu.memory_space<vmem>>, vector<1x32xf32>
    %11 = vector.broadcast %10 : vector<1x32xf32> to vector<192x32xf32>
    %12 = arith.addf %9, %11 : vector<192x32xf32>
    %13 = vector.extract_strided_slice %6 {offsets = [0, 0], sizes = [144, 4], strides = [1, 1]} : vector<192x4xbf16> to vector<144x4xbf16>
    %c0_8 = arith.constant 0 : index
    %c0_9 = arith.constant 0 : index
    %c0_10 = arith.constant 0 : index
    %14 = vector.load %arg3[%c0_8, %c0_9, %c0_10] : memref<3x4x32xbf16, #tpu.memory_space<vmem>>, vector<1x4x32xbf16>
    %15 = vector.shape_cast %14 : vector<1x4x32xbf16> to vector<4x32xbf16>
    %cst_11 = arith.constant dense<0.000000e+00> : vector<144x32xf32>
    %16 = tpu.matmul %13, %15, %cst_11 {dimension_numbers = #tpu.dot_dimension_numbers<[1], [0], [0], [1], [0, 0, 1, 1], [], []>} : vector<144x4xbf16>, vector<4x32xbf16>, vector<144x32xf32> -> vector<144x32xf32>
    %17 = vector.extract_strided_slice %6 {offsets = [48, 0], sizes = [144, 4], strides = [1, 1]} : vector<192x4xbf16> to vector<144x4xbf16>
    %c2_12 = arith.constant 2 : index
    %c0_13 = arith.constant 0 : index
    %c0_14 = arith.constant 0 : index
    %18 = vector.load %arg3[%c2_12, %c0_13, %c0_14] : memref<3x4x32xbf16, #tpu.memory_space<vmem>>, vector<1x4x32xbf16>
    %19 = vector.shape_cast %18 : vector<1x4x32xbf16> to vector<4x32xbf16>
    %cst_15 = arith.constant dense<0.000000e+00> : vector<144x32xf32>
    %20 = tpu.matmul %17, %19, %cst_15 {dimension_numbers = #tpu.dot_dimension_numbers<[1], [0], [0], [1], [0, 0, 1, 1], [], []>} : vector<144x4xbf16>, vector<4x32xbf16>, vector<144x32xf32> -> vector<144x32xf32>
    %cst_16 = arith.constant 0.000000e+00 : f32
    %21 = vector.broadcast %cst_16 : f32 to vector<48x32xf32>
    %22 = tpu.concatenate %21, %16 in 0 : vector<48x32xf32>, vector<144x32xf32> -> vector<192x32xf32>
    %23 = arith.addf %12, %22 : vector<192x32xf32>
    %24 = tpu.concatenate %20, %21 in 0 : vector<144x32xf32>, vector<48x32xf32> -> vector<192x32xf32>
    %25 = arith.addf %23, %24 : vector<192x32xf32>
    %cst_17 = arith.constant 0.000000e+00 : f32
    %26 = vector.broadcast %cst_17 : f32 to vector<192x32xf32>
    %27 = arith.cmpf oge, %25, %26 : vector<192x32xf32>
    %28 = vector.broadcast %0 : f32 to vector<192x32xf32>
    %29 = arith.mulf %28, %25 : vector<192x32xf32>
    %30 = arith.select %27, %25, %29 : vector<192x32xi1>, vector<192x32xf32>
    %31 = arith.truncf %30 : vector<192x32xf32> to vector<192x32xbf16>
    %c1_18 = arith.constant 1 : index
    %c0_19 = arith.constant 0 : index
    %c0_20 = arith.constant 0 : index
    %32 = vector.load %arg5[%c1_18, %c0_19, %c0_20] : memref<3x32x32xbf16, #tpu.memory_space<vmem>>, vector<1x32x32xbf16>
    %33 = vector.shape_cast %32 : vector<1x32x32xbf16> to vector<32x32xbf16>
    %cst_21 = arith.constant dense<0.000000e+00> : vector<192x32xf32>
    %34 = tpu.matmul %31, %33, %cst_21 {dimension_numbers = #tpu.dot_dimension_numbers<[1], [0], [0], [1], [0, 0, 1, 1], [], []>} : vector<192x32xbf16>, vector<32x32xbf16>, vector<192x32xf32> -> vector<192x32xf32>
    %c0_22 = arith.constant 0 : index
    %c0_23 = arith.constant 0 : index
    %35 = vector.load %arg6[%c0_22, %c0_23] : memref<1x32xf32, #tpu.memory_space<vmem>>, vector<1x32xf32>
    %36 = vector.broadcast %35 : vector<1x32xf32> to vector<192x32xf32>
    %37 = arith.addf %34, %36 : vector<192x32xf32>
    %38 = vector.extract_strided_slice %31 {offsets = [0, 0], sizes = [144, 32], strides = [1, 1]} : vector<192x32xbf16> to vector<144x32xbf16>
    %c0_24 = arith.constant 0 : index
    %c0_25 = arith.constant 0 : index
    %c0_26 = arith.constant 0 : index
    %39 = vector.load %arg5[%c0_24, %c0_25, %c0_26] : memref<3x32x32xbf16, #tpu.memory_space<vmem>>, vector<1x32x32xbf16>
    %40 = vector.shape_cast %39 : vector<1x32x32xbf16> to vector<32x32xbf16>
    %cst_27 = arith.constant dense<0.000000e+00> : vector<144x32xf32>
    %41 = tpu.matmul %38, %40, %cst_27 {dimension_numbers = #tpu.dot_dimension_numbers<[1], [0], [0], [1], [0, 0, 1, 1], [], []>} : vector<144x32xbf16>, vector<32x32xbf16>, vector<144x32xf32> -> vector<144x32xf32>
    %42 = vector.extract_strided_slice %31 {offsets = [48, 0], sizes = [144, 32], strides = [1, 1]} : vector<192x32xbf16> to vector<144x32xbf16>
    %c2_28 = arith.constant 2 : index
    %c0_29 = arith.constant 0 : index
    %c0_30 = arith.constant 0 : index
    %43 = vector.load %arg5[%c2_28, %c0_29, %c0_30] : memref<3x32x32xbf16, #tpu.memory_space<vmem>>, vector<1x32x32xbf16>
    %44 = vector.shape_cast %43 : vector<1x32x32xbf16> to vector<32x32xbf16>
    %cst_31 = arith.constant dense<0.000000e+00> : vector<144x32xf32>
    %45 = tpu.matmul %42, %44, %cst_31 {dimension_numbers = #tpu.dot_dimension_numbers<[1], [0], [0], [1], [0, 0, 1, 1], [], []>} : vector<144x32xbf16>, vector<32x32xbf16>, vector<144x32xf32> -> vector<144x32xf32>
    %cst_32 = arith.constant 0.000000e+00 : f32
    %46 = vector.broadcast %cst_32 : f32 to vector<48x32xf32>
    %47 = tpu.concatenate %46, %41 in 0 : vector<48x32xf32>, vector<144x32xf32> -> vector<192x32xf32>
    %48 = arith.addf %37, %47 : vector<192x32xf32>
    %49 = tpu.concatenate %45, %46 in 0 : vector<144x32xf32>, vector<48x32xf32> -> vector<192x32xf32>
    %50 = arith.addf %48, %49 : vector<192x32xf32>
    %cst_33 = arith.constant 0.000000e+00 : f32
    %51 = vector.broadcast %cst_33 : f32 to vector<192x32xf32>
    %52 = arith.cmpf oge, %50, %51 : vector<192x32xf32>
    %53 = vector.broadcast %1 : f32 to vector<192x32xf32>
    %54 = arith.mulf %53, %50 : vector<192x32xf32>
    %55 = arith.select %52, %50, %54 : vector<192x32xi1>, vector<192x32xf32>
    %56 = arith.truncf %55 : vector<192x32xf32> to vector<192x32xbf16>
    %c1_34 = arith.constant 1 : index
    %c0_35 = arith.constant 0 : index
    %c0_36 = arith.constant 0 : index
    %57 = vector.load %arg7[%c1_34, %c0_35, %c0_36] : memref<3x32x32xbf16, #tpu.memory_space<vmem>>, vector<1x32x32xbf16>
    %58 = vector.shape_cast %57 : vector<1x32x32xbf16> to vector<32x32xbf16>
    %cst_37 = arith.constant dense<0.000000e+00> : vector<192x32xf32>
    %59 = tpu.matmul %56, %58, %cst_37 {dimension_numbers = #tpu.dot_dimension_numbers<[1], [0], [0], [1], [0, 0, 1, 1], [], []>} : vector<192x32xbf16>, vector<32x32xbf16>, vector<192x32xf32> -> vector<192x32xf32>
    %c0_38 = arith.constant 0 : index
    %c0_39 = arith.constant 0 : index
    %60 = vector.load %arg8[%c0_38, %c0_39] : memref<1x32xf32, #tpu.memory_space<vmem>>, vector<1x32xf32>
    %61 = vector.broadcast %60 : vector<1x32xf32> to vector<192x32xf32>
    %62 = arith.addf %59, %61 : vector<192x32xf32>
    %63 = vector.extract_strided_slice %56 {offsets = [0, 0], sizes = [144, 32], strides = [1, 1]} : vector<192x32xbf16> to vector<144x32xbf16>
    %c0_40 = arith.constant 0 : index
    %c0_41 = arith.constant 0 : index
    %c0_42 = arith.constant 0 : index
    %64 = vector.load %arg7[%c0_40, %c0_41, %c0_42] : memref<3x32x32xbf16, #tpu.memory_space<vmem>>, vector<1x32x32xbf16>
    %65 = vector.shape_cast %64 : vector<1x32x32xbf16> to vector<32x32xbf16>
    %cst_43 = arith.constant dense<0.000000e+00> : vector<144x32xf32>
    %66 = tpu.matmul %63, %65, %cst_43 {dimension_numbers = #tpu.dot_dimension_numbers<[1], [0], [0], [1], [0, 0, 1, 1], [], []>} : vector<144x32xbf16>, vector<32x32xbf16>, vector<144x32xf32> -> vector<144x32xf32>
    %67 = vector.extract_strided_slice %56 {offsets = [48, 0], sizes = [144, 32], strides = [1, 1]} : vector<192x32xbf16> to vector<144x32xbf16>
    %c2_44 = arith.constant 2 : index
    %c0_45 = arith.constant 0 : index
    %c0_46 = arith.constant 0 : index
    %68 = vector.load %arg7[%c2_44, %c0_45, %c0_46] : memref<3x32x32xbf16, #tpu.memory_space<vmem>>, vector<1x32x32xbf16>
    %69 = vector.shape_cast %68 : vector<1x32x32xbf16> to vector<32x32xbf16>
    %cst_47 = arith.constant dense<0.000000e+00> : vector<144x32xf32>
    %70 = tpu.matmul %67, %69, %cst_47 {dimension_numbers = #tpu.dot_dimension_numbers<[1], [0], [0], [1], [0, 0, 1, 1], [], []>} : vector<144x32xbf16>, vector<32x32xbf16>, vector<144x32xf32> -> vector<144x32xf32>
    %cst_48 = arith.constant 0.000000e+00 : f32
    %71 = vector.broadcast %cst_48 : f32 to vector<48x32xf32>
    %72 = tpu.concatenate %71, %66 in 0 : vector<48x32xf32>, vector<144x32xf32> -> vector<192x32xf32>
    %73 = arith.addf %62, %72 : vector<192x32xf32>
    %74 = tpu.concatenate %70, %71 in 0 : vector<144x32xf32>, vector<48x32xf32> -> vector<192x32xf32>
    %75 = arith.addf %73, %74 : vector<192x32xf32>
    %cst_49 = arith.constant 0.000000e+00 : f32
    %76 = vector.broadcast %cst_49 : f32 to vector<192x32xf32>
    %77 = arith.cmpf oge, %75, %76 : vector<192x32xf32>
    %78 = vector.broadcast %2 : f32 to vector<192x32xf32>
    %79 = arith.mulf %78, %75 : vector<192x32xf32>
    %80 = arith.select %77, %75, %79 : vector<192x32xi1>, vector<192x32xf32>
    %81 = arith.truncf %80 : vector<192x32xf32> to vector<192x32xbf16>
    %c1_50 = arith.constant 1 : index
    %c0_51 = arith.constant 0 : index
    %c0_52 = arith.constant 0 : index
    %82 = vector.load %arg9[%c1_50, %c0_51, %c0_52] : memref<3x32x32xbf16, #tpu.memory_space<vmem>>, vector<1x32x32xbf16>
    %83 = vector.shape_cast %82 : vector<1x32x32xbf16> to vector<32x32xbf16>
    %cst_53 = arith.constant dense<0.000000e+00> : vector<192x32xf32>
    %84 = tpu.matmul %81, %83, %cst_53 {dimension_numbers = #tpu.dot_dimension_numbers<[1], [0], [0], [1], [0, 0, 1, 1], [], []>} : vector<192x32xbf16>, vector<32x32xbf16>, vector<192x32xf32> -> vector<192x32xf32>
    %c0_54 = arith.constant 0 : index
    %c0_55 = arith.constant 0 : index
    %85 = vector.load %arg10[%c0_54, %c0_55] : memref<1x32xf32, #tpu.memory_space<vmem>>, vector<1x32xf32>
    %86 = vector.broadcast %85 : vector<1x32xf32> to vector<192x32xf32>
    %87 = arith.addf %84, %86 : vector<192x32xf32>
    %88 = vector.extract_strided_slice %81 {offsets = [0, 0], sizes = [144, 32], strides = [1, 1]} : vector<192x32xbf16> to vector<144x32xbf16>
    %c0_56 = arith.constant 0 : index
    %c0_57 = arith.constant 0 : index
    %c0_58 = arith.constant 0 : index
    %89 = vector.load %arg9[%c0_56, %c0_57, %c0_58] : memref<3x32x32xbf16, #tpu.memory_space<vmem>>, vector<1x32x32xbf16>
    %90 = vector.shape_cast %89 : vector<1x32x32xbf16> to vector<32x32xbf16>
    %cst_59 = arith.constant dense<0.000000e+00> : vector<144x32xf32>
    %91 = tpu.matmul %88, %90, %cst_59 {dimension_numbers = #tpu.dot_dimension_numbers<[1], [0], [0], [1], [0, 0, 1, 1], [], []>} : vector<144x32xbf16>, vector<32x32xbf16>, vector<144x32xf32> -> vector<144x32xf32>
    %92 = vector.extract_strided_slice %81 {offsets = [48, 0], sizes = [144, 32], strides = [1, 1]} : vector<192x32xbf16> to vector<144x32xbf16>
    %c2_60 = arith.constant 2 : index
    %c0_61 = arith.constant 0 : index
    %c0_62 = arith.constant 0 : index
    %93 = vector.load %arg9[%c2_60, %c0_61, %c0_62] : memref<3x32x32xbf16, #tpu.memory_space<vmem>>, vector<1x32x32xbf16>
    %94 = vector.shape_cast %93 : vector<1x32x32xbf16> to vector<32x32xbf16>
    %cst_63 = arith.constant dense<0.000000e+00> : vector<144x32xf32>
    %95 = tpu.matmul %92, %94, %cst_63 {dimension_numbers = #tpu.dot_dimension_numbers<[1], [0], [0], [1], [0, 0, 1, 1], [], []>} : vector<144x32xbf16>, vector<32x32xbf16>, vector<144x32xf32> -> vector<144x32xf32>
    %cst_64 = arith.constant 0.000000e+00 : f32
    %96 = vector.broadcast %cst_64 : f32 to vector<48x32xf32>
    %97 = tpu.concatenate %96, %91 in 0 : vector<48x32xf32>, vector<144x32xf32> -> vector<192x32xf32>
    %98 = arith.addf %87, %97 : vector<192x32xf32>
    %99 = tpu.concatenate %95, %96 in 0 : vector<144x32xf32>, vector<48x32xf32> -> vector<192x32xf32>
    %100 = arith.addf %98, %99 : vector<192x32xf32>
    %cst_65 = arith.constant 0.000000e+00 : f32
    %101 = vector.broadcast %cst_65 : f32 to vector<192x32xf32>
    %102 = arith.cmpf oge, %100, %101 : vector<192x32xf32>
    %103 = vector.broadcast %3 : f32 to vector<192x32xf32>
    %104 = arith.mulf %103, %100 : vector<192x32xf32>
    %105 = arith.select %102, %100, %104 : vector<192x32xi1>, vector<192x32xf32>
    %106 = arith.truncf %105 : vector<192x32xf32> to vector<192x32xbf16>
    %cst_66 = arith.constant 0.000000e+00 : f32
    %107 = vector.broadcast %cst_66 : f32 to vector<48x16xf32>
    %108 = vector.extract_strided_slice %106 {offsets = [0, 0], sizes = [48, 32], strides = [1, 1]} : vector<192x32xbf16> to vector<48x32xbf16>
    %c0_67 = arith.constant 0 : index
    %c0_68 = arith.constant 0 : index
    %c0_69 = arith.constant 0 : index
    %109 = vector.load %arg11[%c0_67, %c0_68, %c0_69] : memref<4x32x16xbf16, #tpu.memory_space<vmem>>, vector<1x32x16xbf16>
    %110 = vector.shape_cast %109 : vector<1x32x16xbf16> to vector<32x16xbf16>
    %cst_70 = arith.constant dense<0.000000e+00> : vector<48x16xf32>
    %111 = tpu.matmul %108, %110, %cst_70 {dimension_numbers = #tpu.dot_dimension_numbers<[1], [0], [0], [1], [0, 0, 1, 1], [], []>} : vector<48x32xbf16>, vector<32x16xbf16>, vector<48x16xf32> -> vector<48x16xf32>
    %112 = arith.addf %107, %111 : vector<48x16xf32>
    %113 = vector.extract_strided_slice %106 {offsets = [48, 0], sizes = [48, 32], strides = [1, 1]} : vector<192x32xbf16> to vector<48x32xbf16>
    %c1_71 = arith.constant 1 : index
    %c0_72 = arith.constant 0 : index
    %c0_73 = arith.constant 0 : index
    %114 = vector.load %arg11[%c1_71, %c0_72, %c0_73] : memref<4x32x16xbf16, #tpu.memory_space<vmem>>, vector<1x32x16xbf16>
    %115 = vector.shape_cast %114 : vector<1x32x16xbf16> to vector<32x16xbf16>
    %cst_74 = arith.constant dense<0.000000e+00> : vector<48x16xf32>
    %116 = tpu.matmul %113, %115, %cst_74 {dimension_numbers = #tpu.dot_dimension_numbers<[1], [0], [0], [1], [0, 0, 1, 1], [], []>} : vector<48x32xbf16>, vector<32x16xbf16>, vector<48x16xf32> -> vector<48x16xf32>
    %117 = arith.addf %112, %116 : vector<48x16xf32>
    %118 = vector.extract_strided_slice %106 {offsets = [96, 0], sizes = [48, 32], strides = [1, 1]} : vector<192x32xbf16> to vector<48x32xbf16>
    %c2_75 = arith.constant 2 : index
    %c0_76 = arith.constant 0 : index
    %c0_77 = arith.constant 0 : index
    %119 = vector.load %arg11[%c2_75, %c0_76, %c0_77] : memref<4x32x16xbf16, #tpu.memory_space<vmem>>, vector<1x32x16xbf16>
    %120 = vector.shape_cast %119 : vector<1x32x16xbf16> to vector<32x16xbf16>
    %cst_78 = arith.constant dense<0.000000e+00> : vector<48x16xf32>
    %121 = tpu.matmul %118, %120, %cst_78 {dimension_numbers = #tpu.dot_dimension_numbers<[1], [0], [0], [1], [0, 0, 1, 1], [], []>} : vector<48x32xbf16>, vector<32x16xbf16>, vector<48x16xf32> -> vector<48x16xf32>
    %122 = arith.addf %117, %121 : vector<48x16xf32>
    %123 = vector.extract_strided_slice %106 {offsets = [144, 0], sizes = [48, 32], strides = [1, 1]} : vector<192x32xbf16> to vector<48x32xbf16>
    %c3_79 = arith.constant 3 : index
    %c0_80 = arith.constant 0 : index
    %c0_81 = arith.constant 0 : index
    %124 = vector.load %arg11[%c3_79, %c0_80, %c0_81] : memref<4x32x16xbf16, #tpu.memory_space<vmem>>, vector<1x32x16xbf16>
    %125 = vector.shape_cast %124 : vector<1x32x16xbf16> to vector<32x16xbf16>
    %cst_82 = arith.constant dense<0.000000e+00> : vector<48x16xf32>
    %126 = tpu.matmul %123, %125, %cst_82 {dimension_numbers = #tpu.dot_dimension_numbers<[1], [0], [0], [1], [0, 0, 1, 1], [], []>} : vector<48x32xbf16>, vector<32x16xbf16>, vector<48x16xf32> -> vector<48x16xf32>
    %127 = arith.addf %122, %126 : vector<48x16xf32>
    %c0_83 = arith.constant 0 : index
    %c0_84 = arith.constant 0 : index
    %128 = vector.load %arg12[%c0_83, %c0_84] : memref<1x16xf32, #tpu.memory_space<vmem>>, vector<1x16xf32>
    %129 = vector.broadcast %128 : vector<1x16xf32> to vector<48x16xf32>
    %130 = arith.addf %127, %129 : vector<48x16xf32>
    %cst_85 = arith.constant 0.000000e+00 : f32
    %131 = vector.broadcast %cst_85 : f32 to vector<48x16xf32>
    %132 = arith.cmpf oge, %130, %131 : vector<48x16xf32>
    %133 = vector.broadcast %4 : f32 to vector<48x16xf32>
    %134 = arith.mulf %133, %130 : vector<48x16xf32>
    %135 = arith.select %132, %130, %134 : vector<48x16xi1>, vector<48x16xf32>
    %c0_86 = arith.constant 0 : index
    %c0_87 = arith.constant 0 : index
    %136 = vector.load %arg13[%c0_86, %c0_87] : memref<48x16xf32, #tpu.memory_space<vmem>>, vector<48x16xf32>
    tpu.vector_store %arg13[%c0_86, %c0_87], %135 {strides = array<i32>} : memref<48x16xf32, #tpu.memory_space<vmem>>, vector<48x16xf32>,
    return
  }
  func.func @transform_0(%arg0: i32) -> i32 {
    %c0_i32 = arith.constant 0 : i32
    %c0_i32_0 = arith.constant 0 : i32
    return %c0_i32 : i32
  }
  func.func @transform_1(%arg0: i32) -> (i32, i32, i32) {
    %c0_i32 = arith.constant 0 : i32
    %c0_i32_0 = arith.constant 0 : i32
    %c0_i32_1 = arith.constant 0 : i32
    return %c0_i32, %arg0, %c0_i32_0 : i32, i32, i32
  }
  func.func @transform_2(%arg0: i32) -> (i32, i32, i32) {
    %c0_i32 = arith.constant 0 : i32
    %c0_i32_0 = arith.constant 0 : i32
    %c0_i32_1 = arith.constant 0 : i32
    %c0_i32_2 = arith.constant 0 : i32
    return %c0_i32, %c0_i32_0, %c0_i32_1 : i32, i32, i32
  }
  func.func @transform_3(%arg0: i32) -> (i32, i32) {
    %c0_i32 = arith.constant 0 : i32
    %c0_i32_0 = arith.constant 0 : i32
    %c0_i32_1 = arith.constant 0 : i32
    return %c0_i32, %c0_i32_0 : i32, i32
  }
  func.func @transform_4(%arg0: i32) -> (i32, i32, i32) {
    %c0_i32 = arith.constant 0 : i32
    %c0_i32_0 = arith.constant 0 : i32
    %c0_i32_1 = arith.constant 0 : i32
    %c0_i32_2 = arith.constant 0 : i32
    return %c0_i32, %c0_i32_0, %c0_i32_1 : i32, i32, i32
  }
  func.func @transform_5(%arg0: i32) -> (i32, i32) {
    %c0_i32 = arith.constant 0 : i32
    %c0_i32_0 = arith.constant 0 : i32
    %c0_i32_1 = arith.constant 0 : i32
    return %c0_i32, %c0_i32_0 : i32, i32
  }
  func.func @transform_6(%arg0: i32) -> (i32, i32, i32) {
    %c0_i32 = arith.constant 0 : i32
    %c0_i32_0 = arith.constant 0 : i32
    %c0_i32_1 = arith.constant 0 : i32
    %c0_i32_2 = arith.constant 0 : i32
    return %c0_i32, %c0_i32_0, %c0_i32_1 : i32, i32, i32
  }
  func.func @transform_7(%arg0: i32) -> (i32, i32) {
    %c0_i32 = arith.constant 0 : i32
    %c0_i32_0 = arith.constant 0 : i32
    %c0_i32_1 = arith.constant 0 : i32
    return %c0_i32, %c0_i32_0 : i32, i32
  }
  func.func @transform_8(%arg0: i32) -> (i32, i32, i32) {
    %c0_i32 = arith.constant 0 : i32
    %c0_i32_0 = arith.constant 0 : i32
    %c0_i32_1 = arith.constant 0 : i32
    %c0_i32_2 = arith.constant 0 : i32
    return %c0_i32, %c0_i32_0, %c0_i32_1 : i32, i32, i32
  }
  func.func @transform_9(%arg0: i32) -> (i32, i32) {
    %c0_i32 = arith.constant 0 : i32
    %c0_i32_0 = arith.constant 0 : i32
    %c0_i32_1 = arith.constant 0 : i32
    return %c0_i32, %c0_i32_0 : i32, i32
  }
  func.func @transform_10(%arg0: i32) -> (i32, i32, i32) {
    %c0_i32 = arith.constant 0 : i32
    %c0_i32_0 = arith.constant 0 : i32
    %c0_i32_1 = arith.constant 0 : i32
    %c0_i32_2 = arith.constant 0 : i32
    return %c0_i32, %c0_i32_0, %c0_i32_1 : i32, i32, i32
  }
  func.func @transform_11(%arg0: i32) -> (i32, i32) {
    %c0_i32 = arith.constant 0 : i32
    %c0_i32_0 = arith.constant 0 : i32
    %c0_i32_1 = arith.constant 0 : i32
    return %c0_i32, %c0_i32_0 : i32, i32
  }
  func.func @transform_12(%arg0: i32) -> (i32, i32) {
    %c0_i32 = arith.constant 0 : i32
    %c0_i32_0 = arith.constant 0 : i32
    return %arg0, %c0_i32 : i32, i32
  }
}

</mosaic_0001>

<llo_original>
// kernel: tpu_custom_call.1
$region0: #{tpu_custom_call.1}
  #allocation0 [shape = 'u32[]', space=smem, size = 0x4, offset = 0x4, fixed_abs, tag = 'smem constant byte address 0x4 - core index']
  #allocation1 [shape = 'u32[144,128]{1,0:T(1,128)}', space=vmem, size = 0x12000, scoped, tag = 'internal scratch']
  %s0 = inlined_call_operand.vmem [shape: f32[5], index: 0, kind: input, shape index: {}]
  %s1 = inlined_call_operand.vmem [shape: bf16[4,48,4], index: 1, kind: input, shape index: {}]
  %s2 = inlined_call_operand.vmem [shape: bf16[3,4,32], index: 2, kind: input, shape index: {}]
  %s3 = inlined_call_operand.vmem [shape: f32[1,32], index: 3, kind: input, shape index: {}]
  %s4 = inlined_call_operand.vmem [shape: bf16[3,32,32], index: 4, kind: input, shape index: {}]
  %s5 = inlined_call_operand.vmem [shape: f32[1,32], index: 5, kind: input, shape index: {}]
  %s6 = inlined_call_operand.vmem [shape: bf16[3,32,32], index: 6, kind: input, shape index: {}]
  %s7 = inlined_call_operand.vmem [shape: f32[1,32], index: 7, kind: input, shape index: {}]
  %s8 = inlined_call_operand.vmem [shape: bf16[3,32,32], index: 8, kind: input, shape index: {}]
  %s9 = inlined_call_operand.vmem [shape: f32[1,32], index: 9, kind: input, shape index: {}]
  %s10 = inlined_call_operand.vmem [shape: bf16[4,32,16], index: 10, kind: input, shape index: {}]
  %s11 = inlined_call_operand.vmem [shape: f32[1,16], index: 11, kind: input, shape index: {}]
  %s12 = inlined_call_operand.vmem [shape: f32[48,16], index: 12, kind: output, shape index: {}]
  %s13 = sld [smem:[#allocation0]]
  $region62: #{tpu_custom_call.1} parent=0
    _
  %s15 = ssub.s32 1, %s13
  %s16 = scalar_select 0, %s15, %s13
  $region1: #{tpu_custom_call.1} parent=0
    #allocation2 [shape = 'u8[512]{0}', space=smem, size = 0x200, scoped, tag = 'input window, operand 0, single buffered']
    #allocation3 [shape = 's32[1]{0}', space=sflag, size = 0x4, scoped, tag = 'scoped memory for tpu_custom_call.1']
    %17 = vsyncpa [#allocation3], 0
    // Predicated region
    $region2: #{tpu_custom_call.1} parent=1 // pred_check
      _
    $region3: #{tpu_custom_call.1} parent=1 // pred_check_branch
      %19 = sbr.rel (0) target = $region5
    $region4: #{tpu_custom_call.1} parent=1 // pred_region
      %s21 = ssub.s32 16, 16
      %22 = vsyncadd [#allocation3], %s21
      %s24 = sshll.u32 %s0, 4
      %s25 = int_to_ptr.vmem [resolvable:$true] %s24
      %27 = dma.vmem_to_smem %s25, 16, [#allocation2], [#allocation3]
    $region5: #{tpu_custom_call.1} parent=1 // pred_fallthru
      _
    // Predicated region
    $region6: #{tpu_custom_call.1} parent=1 // pred_check
      _
    $region7: #{tpu_custom_call.1} parent=1 // pred_check_branch
      %29 = sbr.rel (0) target = $region9
    $region8: #{tpu_custom_call.1} parent=1 // pred_region
      _
    $region9: #{tpu_custom_call.1} parent=1 // pred_fallthru
      _
    // Predicated region
    $region10: #{tpu_custom_call.1} parent=1 // pred_check
      _
    $region11: #{tpu_custom_call.1} parent=1 // pred_check_branch
      %31 = sbr.rel (0) target = $region13
    $region12: #{tpu_custom_call.1} parent=1 // pred_region
      _
    $region13: #{tpu_custom_call.1} parent=1 // pred_fallthru
      _
    // Predicated region
    $region14: #{tpu_custom_call.1} parent=1 // pred_check
      _
    $region15: #{tpu_custom_call.1} parent=1 // pred_check_branch
      %33 = sbr.rel (0) target = $region17
    $region16: #{tpu_custom_call.1} parent=1 // pred_region
      _
    $region17: #{tpu_custom_call.1} parent=1 // pred_fallthru
      _
    // Predicated region
    $region18: #{tpu_custom_call.1} parent=1 // pred_check
      _
    $region19: #{tpu_custom_call.1} parent=1 // pred_check_branch
      %35 = sbr.rel (0) target = $region21
    $region20: #{tpu_custom_call.1} parent=1 // pred_region
      _
    $region21: #{tpu_custom_call.1} parent=1 // pred_fallthru
      _
    // Predicated region
    $region22: #{tpu_custom_call.1} parent=1 // pred_check
      _
    $region23: #{tpu_custom_call.1} parent=1 // pred_check_branch
      %37 = sbr.rel (0) target = $region25
    $region24: #{tpu_custom_call.1} parent=1 // pred_region
      _
    $region25: #{tpu_custom_call.1} parent=1 // pred_fallthru
      _
    // Predicated region
    $region26: #{tpu_custom_call.1} parent=1 // pred_check
      _
    $region27: #{tpu_custom_call.1} parent=1 // pred_check_branch
      %39 = sbr.rel (0) target = $region29
    $region28: #{tpu_custom_call.1} parent=1 // pred_region
      _
    $region29: #{tpu_custom_call.1} parent=1 // pred_fallthru
      _
    // Predicated region
    $region30: #{tpu_custom_call.1} parent=1 // pred_check
      _
    $region31: #{tpu_custom_call.1} parent=1 // pred_check_branch
      %41 = sbr.rel (0) target = $region33
    $region32: #{tpu_custom_call.1} parent=1 // pred_region
      _
    $region33: #{tpu_custom_call.1} parent=1 // pred_fallthru
      _
    // Predicated region
    $region34: #{tpu_custom_call.1} parent=1 // pred_check
      _
    $region35: #{tpu_custom_call.1} parent=1 // pred_check_branch
      %43 = sbr.rel (0) target = $region37
    $region36: #{tpu_custom_call.1} parent=1 // pred_region
      _
    $region37: #{tpu_custom_call.1} parent=1 // pred_fallthru
      _
    // Predicated region
    $region38: #{tpu_custom_call.1} parent=1 // pred_check
      _
    $region39: #{tpu_custom_call.1} parent=1 // pred_check_branch
      %45 = sbr.rel (0) target = $region41
    $region40: #{tpu_custom_call.1} parent=1 // pred_region
      _
    $region41: #{tpu_custom_call.1} parent=1 // pred_fallthru
      _
    // Predicated region
    $region42: #{tpu_custom_call.1} parent=1 // pred_check
      _
    $region43: #{tpu_custom_call.1} parent=1 // pred_check_branch
      %47 = sbr.rel (0) target = $region45
    $region44: #{tpu_custom_call.1} parent=1 // pred_region
      _
    $region45: #{tpu_custom_call.1} parent=1 // pred_fallthru
      _
    // Predicated region
    $region46: #{tpu_custom_call.1} parent=1 // pred_check
      _
    $region47: #{tpu_custom_call.1} parent=1 // pred_check_branch
      %49 = sbr.rel (0) target = $region49
    $region48: #{tpu_custom_call.1} parent=1 // pred_region
      _
    $region49: #{tpu_custom_call.1} parent=1 // pred_fallthru
      _
    // Predicated region
    $region50: #{tpu_custom_call.1} parent=1 // pred_check
      _
    $region51: #{tpu_custom_call.1} parent=1 // pred_check_branch
      %51 = sbr.rel (0) target = $region53
    $region52: #{tpu_custom_call.1} parent=1 // pred_region
      %52 = dma.done [#allocation3], 16
    $region53: #{tpu_custom_call.1} parent=1 // pred_fallthru
      _
    %53 = sfence
    %s55 = sld [smem:[#allocation2]]
    %s56 = sld [smem:[#allocation2 + $0x1]]
    %s57 = sld [smem:[#allocation2 + $0x2]]
    %s58 = sld [smem:[#allocation2 + $0x3]]
    %s59 = sld [smem:[#allocation2 + $0x4]]
    %v60 = vld [vmem:[%s1] sm:$0xf]
    %v61 = vld [vmem:[%s1 + $0x4] sm:$0xf]
    %v62 = vld [vmem:[%s1 + $0x8] sm:$0xf]
    %v63 = vld [vmem:[%s1 + $0xc] sm:$0xf]
    %v64 = vld [vmem:[%s1 + $0x10] sm:$0xf]
    %v65 = vld [vmem:[%s1 + $0x14] sm:$0xf]
    %v66 = vld [vmem:[%s1 + $0x18] sm:$0xf]
    %v67 = vld [vmem:[%s1 + $0x1c] sm:$0xf]
    %v68 = vld [vmem:[%s1 + $0x20] sm:$0xf]
    %v69 = vld [vmem:[%s1 + $0x24] sm:$0xf]
    %v70 = vld [vmem:[%s1 + $0x28] sm:$0xf]
    %v71 = vld [vmem:[%s1 + $0x2c] sm:$0xf]
    %v72 = vld [vmem:[%s1 + $0x30] sm:$0xf]
    %v73 = vld [vmem:[%s1 + $0x34] sm:$0xf]
    %v74 = vld [vmem:[%s1 + $0x38] sm:$0xf]
    %v75 = vld [vmem:[%s1 + $0x3c] sm:$0xf]
    %v76 = vld [vmem:[%s1 + $0x40] sm:$0xf]
    %v77 = vld [vmem:[%s1 + $0x44] sm:$0xf]
    %v78 = vld [vmem:[%s1 + $0x48] sm:$0xf]
    %v79 = vld [vmem:[%s1 + $0x4c] sm:$0xf]
    %v80 = vld [vmem:[%s1 + $0x50] sm:$0xf]
    %v81 = vld [vmem:[%s1 + $0x54] sm:$0xf]
    %v82 = vld [vmem:[%s1 + $0x58] sm:$0xf]
    %v83 = vld [vmem:[%s1 + $0x5c] sm:$0xf]
    %s84 = scalar_lea.vmem %s2, 2
    %v85 = vld [vmem:[%s84] sm:$0x3]
    %v86 = vld [vmem:[%s3] sm:$0x1]
    %v88 = vlaneseq
    %v89 = vshrl.u32 %v88, 7
    %v90 = vsub.s32 0, %v89
    %v91 = vrot.slane %v86, %v90
    %v117 = vunpack.c.l.b16 %v60
    %v118 = vunpack.c.l.b16 %v61
    %v119 = vunpack.c.l.b16 %v62
    %v120 = vunpack.c.l.b16 %v63
    %v121 = vunpack.c.l.b16 %v64
    %v122 = vunpack.c.l.b16 %v65
    %v123 = vunpack.c.l.b16 %v66
    %v124 = vunpack.c.l.b16 %v67
    %v125 = vunpack.c.l.b16 %v68
    %v126 = vunpack.c.l.b16 %v69
    %v127 = vunpack.c.l.b16 %v70
    %v128 = vunpack.c.l.b16 %v71
    %v129 = vunpack.c.l.b16 %v72
    %v130 = vunpack.c.l.b16 %v73
    %v131 = vunpack.c.l.b16 %v74
    %v132 = vunpack.c.l.b16 %v75
    %v133 = vunpack.c.l.b16 %v76
    %v134 = vunpack.c.l.b16 %v77
    %v135 = vunpack.c.l.b16 %v78
    %v136 = vunpack.c.l.b16 %v79
    %v137 = vunpack.c.l.b16 %v80
    %v138 = vunpack.c.l.b16 %v81
    %v139 = vunpack.c.l.b16 %v82
    %v140 = vunpack.c.l.b16 %v83
    %v141 = vpack.c.b16 %v118, %v117
    %v142 = vpack.c.b16 %v120, %v119
    %v143 = vpack.c.b16 %v122, %v121
    %v144 = vpack.c.b16 %v124, %v123
    %v145 = vpack.c.b16 %v126, %v125
    %v146 = vpack.c.b16 %v128, %v127
    %v147 = vpack.c.b16 %v130, %v129
    %v148 = vpack.c.b16 %v132, %v131
    %v149 = vpack.c.b16 %v134, %v133
    %v150 = vpack.c.b16 %v136, %v135
    %v151 = vpack.c.b16 %v138, %v137
    %v152 = vpack.c.b16 %v140, %v139
    %vm153 = vcmask 31744
    %v155 = vsel %vm153, %v141, 0
    %v158 = vsel %vm153, %v142, 0
    %v161 = vsel %vm153, %v143, 0
    %v164 = vsel %vm153, %v144, 0
    %v167 = vsel %vm153, %v145, 0
    %v170 = vsel %vm153, %v146, 0
    %v173 = vsel %vm153, %v147, 0
    %v176 = vsel %vm153, %v148, 0
    %v179 = vsel %vm153, %v149, 0
    %v182 = vsel %vm153, %v150, 0
    %v185 = vsel %vm153, %v151, 0
    %v188 = vsel %vm153, %v152, 0
    %vm190 = vcmask 1041408
    %v192 = vsel %vm190, %v85, 0
    %194 = vmatprep.subr.bf16.mxu0 0
    %195 = vmatpush1.bf16.msra.mxu0 %v192
    %196 = vmatprep.subr.bf16.mxu0 0
    %197 = vmatpush1.bf16.msra.mxu0 0
    %198 = vmatprep.subr.bf16.mxu0 0
    %199 = vmatpush1.bf16.msra.mxu0 0
    %200 = vmatprep.subr.bf16.mxu0 0
    %201 = vmatpush1.bf16.msra.mxu0 0
    %202 = vmatprep.subr.bf16.mxu0 0
    %203 = vmatpush1.bf16.msra.mxu0 0
    %204 = vmatprep.subr.bf16.mxu0 0
    %205 = vmatpush1.bf16.msra.mxu0 0
    %206 = vmatprep.subr.bf16.mxu0 0
    %207 = vmatpush1.bf16.msra.mxu0 0
    %208 = vmatprep.subr.bf16.mxu0 0
    %209 = vmatpush1.bf16.msra.mxu0 0
    %210 = vmatprep.subr.bf16.mxu0 0
    %211 = vmatpush1.bf16.msra.mxu0 0
    %212 = vmatprep.subr.bf16.mxu0 0
    %213 = vmatpush1.bf16.msra.mxu0 0
    %214 = vmatprep.subr.bf16.mxu0 0
    %215 = vmatpush1.bf16.msra.mxu0 0
    %216 = vmatprep.subr.bf16.mxu0 0
    %217 = vmatpush1.bf16.msra.mxu0 0
    %218 = vmatprep.subr.bf16.mxu0 0
    %219 = vmatpush1.bf16.msra.mxu0 0
    %220 = vmatprep.subr.bf16.mxu0 0
    %221 = vmatpush1.bf16.msra.mxu0 0
    %222 = vmatprep.subr.bf16.mxu0 0
    %223 = vmatpush1.bf16.msra.mxu0 0
    %224 = vmatprep.subr.bf16.mxu0 0
    %225 = vmatpush1.bf16.msra.mxu0 0
    %226 = vmatprep.mubr.bf16.mxu0 0
    %227 = vmatmul.mubr.bf16.gmra.mrb[0].mxu0 %v155
    %v228 = vpop.f32.mrb[0].mxu0
    %v229 = vadd.f32 %v91, %v228
    %v230 = vpop.f32.mrb[0].mxu0
    %v231 = vpop.f32.mrb[0].mxu0
    %v232 = vadd.f32 %v91, %v231
    %v233 = vpop.f32.mrb[0].mxu0
    %234 = vmatprep.mubr.bf16.mxu0 0
    %235 = vmatmul.mubr.bf16.gmra.mrb[0].mxu0 %v158
    %v236 = vpop.f32.mrb[0].mxu0
    %v237 = vadd.f32 %v91, %v236
    %v238 = vpop.f32.mrb[0].mxu0
    %v239 = vpop.f32.mrb[0].mxu0
    %v240 = vadd.f32 %v91, %v239
    %v241 = vpop.f32.mrb[0].mxu0
    %242 = vmatprep.mubr.bf16.mxu0 0
    %243 = vmatmul.mubr.bf16.gmra.mrb[0].mxu0 %v161
    %v244 = vpop.f32.mrb[0].mxu0
    %v245 = vadd.f32 %v91, %v244
    %v246 = vpop.f32.mrb[0].mxu0
    %v247 = vpop.f32.mrb[0].mxu0
    %v248 = vadd.f32 %v91, %v247
    %v249 = vpop.f32.mrb[0].mxu0
    %250 = vmatprep.mubr.bf16.mxu0 0
    %251 = vmatmul.mubr.bf16.gmra.mrb[0].mxu0 %v164
    %v252 = vpop.f32.mrb[0].mxu0
    %v253 = vadd.f32 %v91, %v252
    %v254 = vpop.f32.mrb[0].mxu0
    %v255 = vpop.f32.mrb[0].mxu0
    %v256 = vadd.f32 %v91, %v255
    %v257 = vpop.f32.mrb[0].mxu0
    %258 = vmatprep.mubr.bf16.mxu0 0
    %259 = vmatmul.mubr.bf16.gmra.mrb[0].mxu0 %v167
    %v260 = vpop.f32.mrb[0].mxu0
    %v261 = vadd.f32 %v91, %v260
    %v262 = vpop.f32.mrb[0].mxu0
    %v263 = vpop.f32.mrb[0].mxu0
    %v264 = vadd.f32 %v91, %v263
    %v265 = vpop.f32.mrb[0].mxu0
    %266 = vmatprep.mubr.bf16.mxu0 0
    %267 = vmatmul.mubr.bf16.gmra.mrb[0].mxu0 %v170
    %v268 = vpop.f32.mrb[0].mxu0
    %v269 = vadd.f32 %v91, %v268
    %v270 = vpop.f32.mrb[0].mxu0
    %v271 = vpop.f32.mrb[0].mxu0
    %v272 = vadd.f32 %v91, %v271
    %v273 = vpop.f32.mrb[0].mxu0
    %274 = vmatprep.mubr.bf16.mxu0 0
    %275 = vmatmul.mubr.bf16.gmra.mrb[0].mxu0 %v173
    %v276 = vpop.f32.mrb[0].mxu0
    %v277 = vadd.f32 %v91, %v276
    %v278 = vpop.f32.mrb[0].mxu0
    %v279 = vpop.f32.mrb[0].mxu0
    %v280 = vadd.f32 %v91, %v279
    %v281 = vpop.f32.mrb[0].mxu0
    %282 = vmatprep.mubr.bf16.mxu0 0
    %283 = vmatmul.mubr.bf16.gmra.mrb[0].mxu0 %v176
    %v284 = vpop.f32.mrb[0].mxu0
    %v285 = vadd.f32 %v91, %v284
    %v286 = vpop.f32.mrb[0].mxu0
    %v287 = vpop.f32.mrb[0].mxu0
    %v288 = vadd.f32 %v91, %v287
    %v289 = vpop.f32.mrb[0].mxu0
    %290 = vmatprep.mubr.bf16.mxu0 0
    %291 = vmatmul.mubr.bf16.gmra.mrb[0].mxu0 %v179
    %v292 = vpop.f32.mrb[0].mxu0
    %v293 = vadd.f32 %v91, %v292
    %v294 = vpop.f32.mrb[0].mxu0
    %v295 = vpop.f32.mrb[0].mxu0
    %v296 = vadd.f32 %v91, %v295
    %v297 = vpop.f32.mrb[0].mxu0
    %298 = vmatprep.mubr.bf16.mxu0 0
    %299 = vmatmul.mubr.bf16.gmra.mrb[0].mxu0 %v182
    %v300 = vpop.f32.mrb[0].mxu0
    %v301 = vadd.f32 %v91, %v300
    %v302 = vpop.f32.mrb[0].mxu0
    %v303 = vpop.f32.mrb[0].mxu0
    %v304 = vadd.f32 %v91, %v303
    %v305 = vpop.f32.mrb[0].mxu0
    %306 = vmatprep.mubr.bf16.mxu0 0
    %307 = vmatmul.mubr.bf16.gmra.mrb[0].mxu0 %v185
    %v308 = vpop.f32.mrb[0].mxu0
    %v309 = vadd.f32 %v91, %v308
    %v310 = vpop.f32.mrb[0].mxu0
    %v311 = vpop.f32.mrb[0].mxu0
    %v312 = vadd.f32 %v91, %v311
    %v313 = vpop.f32.mrb[0].mxu0
    %314 = vmatprep.mubr.bf16.mxu0 0
    %315 = vmatmul.mubr.bf16.gmra.mrb[0].mxu0 %v188
    %v316 = vpop.f32.mrb[0].mxu0
    %v317 = vadd.f32 %v91, %v316
    %v318 = vpop.f32.mrb[0].mxu0
    %v319 = vpop.f32.mrb[0].mxu0
    %v320 = vadd.f32 %v91, %v319
    %v321 = vpop.f32.mrb[0].mxu0
    %322 = vdwg.mxu0
    %v323 = vld [vmem:[%s2] sm:$0x3]
    %v325 = vsel %vm190, %v323, 0
    %327 = vmatprep.subr.bf16.mxu0 0
    %328 = vmatpush1.bf16.msra.mxu0 %v325
    %329 = vmatprep.subr.bf16.mxu0 0
    %330 = vmatpush1.bf16.msra.mxu0 0
    %331 = vmatprep.subr.bf16.mxu0 0
    %332 = vmatpush1.bf16.msra.mxu0 0
    %333 = vmatprep.subr.bf16.mxu0 0
    %334 = vmatpush1.bf16.msra.mxu0 0
    %335 = vmatprep.subr.bf16.mxu0 0
    %336 = vmatpush1.bf16.msra.mxu0 0
    %337 = vmatprep.subr.bf16.mxu0 0
    %338 = vmatpush1.bf16.msra.mxu0 0
    %339 = vmatprep.subr.bf16.mxu0 0
    %340 = vmatpush1.bf16.msra.mxu0 0
    %341 = vmatprep.subr.bf16.mxu0 0
    %342 = vmatpush1.bf16.msra.mxu0 0
    %343 = vmatprep.subr.bf16.mxu0 0
    %344 = vmatpush1.bf16.msra.mxu0 0
    %345 = vmatprep.subr.bf16.mxu0 0
    %346 = vmatpush1.bf16.msra.mxu0 0
    %347 = vmatprep.subr.bf16.mxu0 0
    %348 = vmatpush1.bf16.msra.mxu0 0
    %349 = vmatprep.subr.bf16.mxu0 0
    %350 = vmatpush1.bf16.msra.mxu0 0
    %351 = vmatprep.subr.bf16.mxu0 0
    %352 = vmatpush1.bf16.msra.mxu0 0
    %353 = vmatprep.subr.bf16.mxu0 0
    %354 = vmatpush1.bf16.msra.mxu0 0
    %355 = vmatprep.subr.bf16.mxu0 0
    %356 = vmatpush1.bf16.msra.mxu0 0
    %357 = vmatprep.subr.bf16.mxu0 0
    %358 = vmatpush1.bf16.msra.mxu0 0
    %359 = vmatprep.mubr.bf16.mxu0 0
    %360 = vmatmul.mubr.bf16.gmra.mrb[0].mxu0 %v155
    %v361 = vpop.f32.mrb[0].mxu0
    %v362 = vadd.f32 0.0, %v361
    %v363 = vpop.f32.mrb[0].mxu0
    %v364 = vpop.f32.mrb[0].mxu0
    %v365 = vadd.f32 0.0, %v364
    %v366 = vpop.f32.mrb[0].mxu0
    %367 = vmatprep.mubr.bf16.mxu0 0
    %368 = vmatmul.mubr.bf16.gmra.mrb[0].mxu0 %v158
    %v369 = vpop.f32.mrb[0].mxu0
    %v370 = vadd.f32 0.0, %v369
    %v371 = vpop.f32.mrb[0].mxu0
    %v372 = vpop.f32.mrb[0].mxu0
    %v373 = vadd.f32 0.0, %v372
    %v374 = vpop.f32.mrb[0].mxu0
    %375 = vmatprep.mubr.bf16.mxu0 0
    %376 = vmatmul.mubr.bf16.gmra.mrb[0].mxu0 %v161
    %v377 = vpop.f32.mrb[0].mxu0
    %v378 = vadd.f32 0.0, %v377
    %v379 = vpop.f32.mrb[0].mxu0
    %v380 = vpop.f32.mrb[0].mxu0
    %v381 = vadd.f32 0.0, %v380
    %v382 = vpop.f32.mrb[0].mxu0
    %383 = vmatprep.mubr.bf16.mxu0 0
    %384 = vmatmul.mubr.bf16.gmra.mrb[0].mxu0 %v164
    %v385 = vpop.f32.mrb[0].mxu0
    %v386 = vadd.f32 0.0, %v385
    %v387 = vpop.f32.mrb[0].mxu0
    %v388 = vpop.f32.mrb[0].mxu0
    %v389 = vadd.f32 0.0, %v388
    %v390 = vpop.f32.mrb[0].mxu0
    %391 = vmatprep.mubr.bf16.mxu0 0
    %392 = vmatmul.mubr.bf16.gmra.mrb[0].mxu0 %v167
    %v393 = vpop.f32.mrb[0].mxu0
    %v394 = vadd.f32 0.0, %v393
    %v395 = vpop.f32.mrb[0].mxu0
    %v396 = vpop.f32.mrb[0].mxu0
    %v397 = vadd.f32 0.0, %v396
    %v398 = vpop.f32.mrb[0].mxu0
    %399 = vmatprep.mubr.bf16.mxu0 0
    %400 = vmatmul.mubr.bf16.gmra.mrb[0].mxu0 %v170
    %v401 = vpop.f32.mrb[0].mxu0
    %v402 = vadd.f32 0.0, %v401
    %v403 = vpop.f32.mrb[0].mxu0
    %v404 = vpop.f32.mrb[0].mxu0
    %v405 = vadd.f32 0.0, %v404
    %v406 = vpop.f32.mrb[0].mxu0
    %407 = vmatprep.mubr.bf16.mxu0 0
    %408 = vmatmul.mubr.bf16.gmra.mrb[0].mxu0 %v173
    %v409 = vpop.f32.mrb[0].mxu0
    %v410 = vadd.f32 0.0, %v409
    %v411 = vpop.f32.mrb[0].mxu0
    %v412 = vpop.f32.mrb[0].mxu0
    %v413 = vadd.f32 0.0, %v412
    %v414 = vpop.f32.mrb[0].mxu0
    %415 = vmatprep.mubr.bf16.mxu0 0
    %416 = vmatmul.mubr.bf16.gmra.mrb[0].mxu0 %v176
    %v417 = vpop.f32.mrb[0].mxu0
    %v418 = vadd.f32 0.0, %v417
    %v419 = vpop.f32.mrb[0].mxu0
    %v420 = vpop.f32.mrb[0].mxu0
    %v421 = vadd.f32 0.0, %v420
    %v422 = vpop.f32.mrb[0].mxu0
    %423 = vmatprep.mubr.bf16.mxu0 0
    %424 = vmatmul.mubr.bf16.gmra.mrb[0].mxu0 %v179
    %v425 = vpop.f32.mrb[0].mxu0
    %v426 = vadd.f32 0.0, %v425
    %v427 = vpop.f32.mrb[0].mxu0
    %v428 = vpop.f32.mrb[0].mxu0
    %v429 = vadd.f32 0.0, %v428
    %v430 = vpop.f32.mrb[0].mxu0
    %431 = vdwg.mxu0
    %s432 = scalar_lea.vmem %s2, 4
    %v433 = vld [vmem:[%s432] sm:$0x3]
    %v435 = vsel %vm190, %v433, 0
    %437 = vmatprep.subr.bf16.mxu0 0
    %438 = vmatpush1.bf16.msra.mxu0 %v435
    %439 = vmatprep.subr.bf16.mxu0 0
    %440 = vmatpush1.bf16.msra.mxu0 0
    %441 = vmatprep.subr.bf16.mxu0 0
    %442 = vmatpush1.bf16.msra.mxu0 0
    %443 = vmatprep.subr.bf16.mxu0 0
    %444 = vmatpush1.bf16.msra.mxu0 0
    %445 = vmatprep.subr.bf16.mxu0 0
    %446 = vmatpush1.bf16.msra.mxu0 0
    %447 = vmatprep.subr.bf16.mxu0 0
    %448 = vmatpush1.bf16.msra.mxu0 0
    %449 = vmatprep.subr.bf16.mxu0 0
    %450 = vmatpush1.bf16.msra.mxu0 0
    %451 = vmatprep.subr.bf16.mxu0 0
    %452 = vmatpush1.bf16.msra.mxu0 0
    %453 = vmatprep.subr.bf16.mxu0 0
    %454 = vmatpush1.bf16.msra.mxu0 0
    %455 = vmatprep.subr.bf16.mxu0 0
    %456 = vmatpush1.bf16.msra.mxu0 0
    %457 = vmatprep.subr.bf16.mxu0 0
    %458 = vmatpush1.bf16.msra.mxu0 0
    %459 = vmatprep.subr.bf16.mxu0 0
    %460 = vmatpush1.bf16.msra.mxu0 0
    %461 = vmatprep.subr.bf16.mxu0 0
    %462 = vmatpush1.bf16.msra.mxu0 0
    %463 = vmatprep.subr.bf16.mxu0 0
    %464 = vmatpush1.bf16.msra.mxu0 0
    %465 = vmatprep.subr.bf16.mxu0 0
    %466 = vmatpush1.bf16.msra.mxu0 0
    %467 = vmatprep.subr.bf16.mxu0 0
    %468 = vmatpush1.bf16.msra.mxu0 0
    %469 = vmatprep.mubr.bf16.mxu0 0
    %470 = vmatmul.mubr.bf16.gmra.mrb[0].mxu0 %v164
    %v471 = vpop.f32.mrb[0].mxu0
    %v472 = vadd.f32 0.0, %v471
    %v473 = vpop.f32.mrb[0].mxu0
    %v474 = vpop.f32.mrb[0].mxu0
    %v475 = vadd.f32 0.0, %v474
    %v476 = vpop.f32.mrb[0].mxu0
    %477 = vmatprep.mubr.bf16.mxu0 0
    %478 = vmatmul.mubr.bf16.gmra.mrb[0].mxu0 %v167
    %v479 = vpop.f32.mrb[0].mxu0
    %v480 = vadd.f32 0.0, %v479
    %v481 = vpop.f32.mrb[0].mxu0
    %v482 = vpop.f32.mrb[0].mxu0
    %v483 = vadd.f32 0.0, %v482
    %v484 = vpop.f32.mrb[0].mxu0
    %485 = vmatprep.mubr.bf16.mxu0 0
    %486 = vmatmul.mubr.bf16.gmra.mrb[0].mxu0 %v170
    %v487 = vpop.f32.mrb[0].mxu0
    %v488 = vadd.f32 0.0, %v487
    %v489 = vpop.f32.mrb[0].mxu0
    %v490 = vpop.f32.mrb[0].mxu0
    %v491 = vadd.f32 0.0, %v490
    %v492 = vpop.f32.mrb[0].mxu0
    %493 = vmatprep.mubr.bf16.mxu0 0
    %494 = vmatmul.mubr.bf16.gmra.mrb[0].mxu0 %v173
    %v495 = vpop.f32.mrb[0].mxu0
    %v496 = vadd.f32 0.0, %v495
    %v497 = vpop.f32.mrb[0].mxu0
    %v498 = vpop.f32.mrb[0].mxu0
    %v499 = vadd.f32 0.0, %v498
    %v500 = vpop.f32.mrb[0].mxu0
    %501 = vmatprep.mubr.bf16.mxu0 0
    %502 = vmatmul.mubr.bf16.gmra.mrb[0].mxu0 %v176
    %v503 = vpop.f32.mrb[0].mxu0
    %v504 = vadd.f32 0.0, %v503
    %v505 = vpop.f32.mrb[0].mxu0
    %v506 = vpop.f32.mrb[0].mxu0
    %v507 = vadd.f32 0.0, %v506
    %v508 = vpop.f32.mrb[0].mxu0
    %509 = vmatprep.mubr.bf16.mxu0 0
    %510 = vmatmul.mubr.bf16.gmra.mrb[0].mxu0 %v179
    %v511 = vpop.f32.mrb[0].mxu0
    %v512 = vadd.f32 0.0, %v511
    %v513 = vpop.f32.mrb[0].mxu0
    %v514 = vpop.f32.mrb[0].mxu0
    %v515 = vadd.f32 0.0, %v514
    %v516 = vpop.f32.mrb[0].mxu0
    %517 = vmatprep.mubr.bf16.mxu0 0
    %518 = vmatmul.mubr.bf16.gmra.mrb[0].mxu0 %v182
    %v519 = vpop.f32.mrb[0].mxu0
    %v520 = vadd.f32 0.0, %v519
    %v521 = vpop.f32.mrb[0].mxu0
    %v522 = vpop.f32.mrb[0].mxu0
    %v523 = vadd.f32 0.0, %v522
    %v524 = vpop.f32.mrb[0].mxu0
    %525 = vmatprep.mubr.bf16.mxu0 0
    %526 = vmatmul.mubr.bf16.gmra.mrb[0].mxu0 %v185
    %v527 = vpop.f32.mrb[0].mxu0
    %v528 = vadd.f32 0.0, %v527
    %v529 = vpop.f32.mrb[0].mxu0
    %v530 = vpop.f32.mrb[0].mxu0
    %v531 = vadd.f32 0.0, %v530
    %v532 = vpop.f32.mrb[0].mxu0
    %533 = vmatprep.mubr.bf16.mxu0 0
    %534 = vmatmul.mubr.bf16.gmra.mrb[0].mxu0 %v188
    %v535 = vpop.f32.mrb[0].mxu0
    %v536 = vadd.f32 0.0, %v535
    %v537 = vpop.f32.mrb[0].mxu0
    %v538 = vpop.f32.mrb[0].mxu0
    %v539 = vadd.f32 0.0, %v538
    %v540 = vpop.f32.mrb[0].mxu0
    %541 = vdwg.mxu0
    %v542 = vadd.f32 %v229, 0.0
    %v543 = vadd.f32 %v232, 0.0
    %v544 = vadd.f32 %v237, 0.0
    %v545 = vadd.f32 %v240, 0.0
    %v546 = vadd.f32 %v245, 0.0
    %v547 = vadd.f32 %v248, 0.0
    %v548 = vadd.f32 %v253, %v362
    %v549 = vadd.f32 %v256, %v365
    %v550 = vadd.f32 %v261, %v370
    %v551 = vadd.f32 %v264, %v373
    %v552 = vadd.f32 %v269, %v378
    %v553 = vadd.f32 %v272, %v381
    %v554 = vadd.f32 %v277, %v386
    %v555 = vadd.f32 %v280, %v389
    %v556 = vadd.f32 %v285, %v394
    %v557 = vadd.f32 %v288, %v397
    %v558 = vadd.f32 %v293, %v402
    %v559 = vadd.f32 %v296, %v405
    %v560 = vadd.f32 %v301, %v410
    %v561 = vadd.f32 %v304, %v413
    %v562 = vadd.f32 %v309, %v418
    %v563 = vadd.f32 %v312, %v421
    %v564 = vadd.f32 %v317, %v426
    %v565 = vadd.f32 %v320, %v429
    %v566 = vadd.f32 %v542, %v472
    %v567 = vadd.f32 %v543, %v475
    %v568 = vadd.f32 %v544, %v480
    %v569 = vadd.f32 %v545, %v483
    %v570 = vadd.f32 %v546, %v488
    %v571 = vadd.f32 %v547, %v491
    %v572 = vadd.f32 %v548, %v496
    %v573 = vadd.f32 %v549, %v499
    %v574 = vadd.f32 %v550, %v504
    %v575 = vadd.f32 %v551, %v507
    %v576 = vadd.f32 %v552, %v512
    %v577 = vadd.f32 %v553, %v515
    %v578 = vadd.f32 %v554, %v520
    %v579 = vadd.f32 %v555, %v523
    %v580 = vadd.f32 %v556, %v528
    %v581 = vadd.f32 %v557, %v531
    %v582 = vadd.f32 %v558, %v536
    %v583 = vadd.f32 %v559, %v539
    %v584 = vadd.f32 %v560, 0.0
    %v585 = vadd.f32 %v561, 0.0
    %v586 = vadd.f32 %v562, 0.0
    %v587 = vadd.f32 %v563, 0.0
    %v588 = vadd.f32 %v564, 0.0
    %v589 = vadd.f32 %v565, 0.0
    %vm590 = vcmp.ge.f32.partialorder %v566, 0.0
    %vm591 = vcmp.ge.f32.partialorder %v567, 0.0
    %vm592 = vcmp.ge.f32.partialorder %v568, 0.0
    %vm593 = vcmp.ge.f32.partialorder %v569, 0.0
    %vm594 = vcmp.ge.f32.partialorder %v570, 0.0
    %vm595 = vcmp.ge.f32.partialorder %v571, 0.0
    %vm596 = vcmp.ge.f32.partialorder %v572, 0.0
    %vm597 = vcmp.ge.f32.partialorder %v573, 0.0
    %vm598 = vcmp.ge.f32.partialorder %v574, 0.0
    %vm599 = vcmp.ge.f32.partialorder %v575, 0.0
    %vm600 = vcmp.ge.f32.partialorder %v576, 0.0
    %vm601 = vcmp.ge.f32.partialorder %v577, 0.0
    %vm602 = vcmp.ge.f32.partialorder %v578, 0.0
    %vm603 = vcmp.ge.f32.partialorder %v579, 0.0
    %vm604 = vcmp.ge.f32.partialorder %v580, 0.0
    %vm605 = vcmp.ge.f32.partialorder %v581, 0.0
    %vm606 = vcmp.ge.f32.partialorder %v582, 0.0
    %vm607 = vcmp.ge.f32.partialorder %v583, 0.0
    %vm608 = vcmp.ge.f32.partialorder %v584, 0.0
    %vm609 = vcmp.ge.f32.partialorder %v585, 0.0
    %vm610 = vcmp.ge.f32.partialorder %v586, 0.0
    %vm611 = vcmp.ge.f32.partialorder %v587, 0.0
    %vm612 = vcmp.ge.f32.partialorder %v588, 0.0
    %vm613 = vcmp.ge.f32.partialorder %v589, 0.0
    %v614 = vstv %s55
    %v615 = vmul.f32 %v614, %v566
    %v616 = vmul.f32 %v614, %v567
    %v617 = vmul.f32 %v614, %v568
    %v618 = vmul.f32 %v614, %v569
    %v619 = vmul.f32 %v614, %v570
    %v620 = vmul.f32 %v614, %v571
    %v621 = vmul.f32 %v614, %v572
    %v622 = vmul.f32 %v614, %v573
    %v623 = vmul.f32 %v614, %v574
    %v624 = vmul.f32 %v614, %v575
    %v625 = vmul.f32 %v614, %v576
    %v626 = vmul.f32 %v614, %v577
    %v627 = vmul.f32 %v614, %v578
    %v628 = vmul.f32 %v614, %v579
    %v629 = vmul.f32 %v614, %v580
    %v630 = vmul.f32 %v614, %v581
    %v631 = vmul.f32 %v614, %v582
    %v632 = vmul.f32 %v614, %v583
    %v633 = vmul.f32 %v614, %v584
    %v634 = vmul.f32 %v614, %v585
    %v635 = vmul.f32 %v614, %v586
    %v636 = vmul.f32 %v614, %v587
    %v637 = vmul.f32 %v614, %v588
    %v638 = vmul.f32 %v614, %v589
    %v639 = vsel %vm590, %v566, %v615
    %v640 = vsel %vm591, %v567, %v616
    %v641 = vsel %vm592, %v568, %v617
    %v642 = vsel %vm593, %v569, %v618
    %v643 = vsel %vm594, %v570, %v619
    %v644 = vsel %vm595, %v571, %v620
    %v645 = vsel %vm596, %v572, %v621
    %v646 = vsel %vm597, %v573, %v622
    %v647 = vsel %vm598, %v574, %v623
    %v648 = vsel %vm599, %v575, %v624
    %v649 = vsel %vm600, %v576, %v625
    %v650 = vsel %vm601, %v577, %v626
    %v651 = vsel %vm602, %v578, %v627
    %v652 = vsel %vm603, %v579, %v628
    %v653 = vsel %vm604, %v580, %v629
    %v654 = vsel %vm605, %v581, %v630
    %v655 = vsel %vm606, %v582, %v631
    %v656 = vsel %vm607, %v583, %v632
    %v657 = vsel %vm608, %v584, %v633
    %v658 = vsel %vm609, %v585, %v634
    %v659 = vsel %vm610, %v586, %v635
    %v660 = vsel %vm611, %v587, %v636
    %v661 = vsel %vm612, %v588, %v637
    %v662 = vsel %vm613, %v589, %v638
    %v663 = vpack.c.bf16 %v640, %v639
    %v664 = vpack.c.bf16 %v642, %v641
    %v665 = vpack.c.bf16 %v644, %v643
    %v666 = vpack.c.bf16 %v646, %v645
    %v667 = vpack.c.bf16 %v648, %v647
    %v668 = vpack.c.bf16 %v650, %v649
    %v669 = vpack.c.bf16 %v652, %v651
    %v670 = vpack.c.bf16 %v654, %v653
    %v671 = vpack.c.bf16 %v656, %v655
    %v672 = vpack.c.bf16 %v658, %v657
    %v673 = vpack.c.bf16 %v660, %v659
    %v674 = vpack.c.bf16 %v662, %v661
    %s675 = scalar_lea.vmem %s4, 16
    %v676 = vld [vmem:[%s675] sm:$0xf]
    %v677 = vld [vmem:[%s675 + $0x4] sm:$0xf]
    %v678 = vld [vmem:[%s675 + $0x8] sm:$0xf]
    %v679 = vld [vmem:[%s675 + $0xc] sm:$0xf]
    %v680 = vld [vmem:[%s5] sm:$0x1]
    %v682 = vlaneseq
    %v683 = vshrl.u32 %v682, 7
    %v684 = vsub.s32 0, %v683
    %v685 = vrot.slane %v680, %v684
    %v691 = vunpack.c.l.b16 %v676
    %v692 = vunpack.c.l.b16 %v677
    %v693 = vunpack.c.l.b16 %v678
    %v694 = vunpack.c.l.b16 %v679
    %v695 = vpack.c.b16 %v692, %v691
    %v696 = vpack.c.b16 %v694, %v693
    %vm699 = vcmask 261120
    %v701 = vsel %vm699, %v663, 0
    %v704 = vsel %vm699, %v664, 0
    %v707 = vsel %vm699, %v665, 0
    %v710 = vsel %vm699, %v666, 0
    %v713 = vsel %vm699, %v667, 0
    %v716 = vsel %vm699, %v668, 0
    %v719 = vsel %vm699, %v669, 0
    %v722 = vsel %vm699, %v670, 0
    %v725 = vsel %vm699, %v671, 0
    %v728 = vsel %vm699, %v672, 0
    %v731 = vsel %vm699, %v673, 0
    %v734 = vsel %vm699, %v674, 0
    %736 = vmatprep.subr.bf16.mxu0 0
    %737 = vmatpush1.bf16.msra.mxu0 %v695
    %738 = vmatprep.subr.bf16.mxu0 0
    %739 = vmatpush1.bf16.msra.mxu0 %v696
    %740 = vmatprep.subr.bf16.mxu0 0
    %741 = vmatpush1.bf16.msra.mxu0 0
    %742 = vmatprep.subr.bf16.mxu0 0
    %743 = vmatpush1.bf16.msra.mxu0 0
    %744 = vmatprep.subr.bf16.mxu0 0
    %745 = vmatpush1.bf16.msra.mxu0 0
    %746 = vmatprep.subr.bf16.mxu0 0
    %747 = vmatpush1.bf16.msra.mxu0 0
    %748 = vmatprep.subr.bf16.mxu0 0
    %749 = vmatpush1.bf16.msra.mxu0 0
    %750 = vmatprep.subr.bf16.mxu0 0
    %751 = vmatpush1.bf16.msra.mxu0 0
    %752 = vmatprep.subr.bf16.mxu0 0
    %753 = vmatpush1.bf16.msra.mxu0 0
    %754 = vmatprep.subr.bf16.mxu0 0
    %755 = vmatpush1.bf16.msra.mxu0 0
    %756 = vmatprep.subr.bf16.mxu0 0
    %757 = vmatpush1.bf16.msra.mxu0 0
    %758 = vmatprep.subr.bf16.mxu0 0
    %759 = vmatpush1.bf16.msra.mxu0 0
    %760 = vmatprep.subr.bf16.mxu0 0
    %761 = vmatpush1.bf16.msra.mxu0 0
    %762 = vmatprep.subr.bf16.mxu0 0
    %763 = vmatpush1.bf16.msra.mxu0 0
    %764 = vmatprep.subr.bf16.mxu0 0
    %765 = vmatpush1.bf16.msra.mxu0 0
    %766 = vmatprep.subr.bf16.mxu0 0
    %767 = vmatpush1.bf16.msra.mxu0 0
    %768 = vmatprep.mubr.bf16.mxu0 0
    %769 = vmatmul.mubr.bf16.gmra.mrb[0].mxu0 %v701
    %v770 = vpop.f32.mrb[0].mxu0
    %v771 = vadd.f32 %v685, %v770
    %v772 = vpop.f32.mrb[0].mxu0
    %v773 = vpop.f32.mrb[0].mxu0
    %v774 = vadd.f32 %v685, %v773
    %v775 = vpop.f32.mrb[0].mxu0
    %776 = vmatprep.mubr.bf16.mxu0 0
    %777 = vmatmul.mubr.bf16.gmra.mrb[0].mxu0 %v704
    %v778 = vpop.f32.mrb[0].mxu0
    %v779 = vadd.f32 %v685, %v778
    %v780 = vpop.f32.mrb[0].mxu0
    %v781 = vpop.f32.mrb[0].mxu0
    %v782 = vadd.f32 %v685, %v781
    %v783 = vpop.f32.mrb[0].mxu0
    %784 = vmatprep.mubr.bf16.mxu0 0
    %785 = vmatmul.mubr.bf16.gmra.mrb[0].mxu0 %v707
    %v786 = vpop.f32.mrb[0].mxu0
    %v787 = vadd.f32 %v685, %v786
    %v788 = vpop.f32.mrb[0].mxu0
    %v789 = vpop.f32.mrb[0].mxu0
    %v790 = vadd.f32 %v685, %v789
    %v791 = vpop.f32.mrb[0].mxu0
    %792 = vmatprep.mubr.bf16.mxu0 0
    %793 = vmatmul.mubr.bf16.gmra.mrb[0].mxu0 %v710
    %v794 = vpop.f32.mrb[0].mxu0
    %v795 = vadd.f32 %v685, %v794
    %v796 = vpop.f32.mrb[0].mxu0
    %v797 = vpop.f32.mrb[0].mxu0
    %v798 = vadd.f32 %v685, %v797
    %v799 = vpop.f32.mrb[0].mxu0
    %800 = vmatprep.mubr.bf16.mxu0 0
    %801 = vmatmul.mubr.bf16.gmra.mrb[0].mxu0 %v713
    %v802 = vpop.f32.mrb[0].mxu0
    %v803 = vadd.f32 %v685, %v802
    %v804 = vpop.f32.mrb[0].mxu0
    %v805 = vpop.f32.mrb[0].mxu0
    %v806 = vadd.f32 %v685, %v805
    %v807 = vpop.f32.mrb[0].mxu0
    %808 = vmatprep.mubr.bf16.mxu0 0
    %809 = vmatmul.mubr.bf16.gmra.mrb[0].mxu0 %v716
    %v810 = vpop.f32.mrb[0].mxu0
    %v811 = vadd.f32 %v685, %v810
    %v812 = vpop.f32.mrb[0].mxu0
    %v813 = vpop.f32.mrb[0].mxu0
    %v814 = vadd.f32 %v685, %v813
    %v815 = vpop.f32.mrb[0].mxu0
    %816 = vmatprep.mubr.bf16.mxu0 0
    %817 = vmatmul.mubr.bf16.gmra.mrb[0].mxu0 %v719
    %v818 = vpop.f32.mrb[0].mxu0
    %v819 = vadd.f32 %v685, %v818
    %v820 = vpop.f32.mrb[0].mxu0
    %v821 = vpop.f32.mrb[0].mxu0
    %v822 = vadd.f32 %v685, %v821
    %v823 = vpop.f32.mrb[0].mxu0
    %824 = vmatprep.mubr.bf16.mxu0 0
    %825 = vmatmul.mubr.bf16.gmra.mrb[0].mxu0 %v722
    %v826 = vpop.f32.mrb[0].mxu0
    %v827 = vadd.f32 %v685, %v826
    %v828 = vpop.f32.mrb[0].mxu0
    %v829 = vpop.f32.mrb[0].mxu0
    %v830 = vadd.f32 %v685, %v829
    %v831 = vpop.f32.mrb[0].mxu0
    %832 = vmatprep.mubr.bf16.mxu0 0
    %833 = vmatmul.mubr.bf16.gmra.mrb[0].mxu0 %v725
    %v834 = vpop.f32.mrb[0].mxu0
    %v835 = vadd.f32 %v685, %v834
    %v836 = vpop.f32.mrb[0].mxu0
    %v837 = vpop.f32.mrb[0].mxu0
    %v838 = vadd.f32 %v685, %v837
    %v839 = vpop.f32.mrb[0].mxu0
    %840 = vmatprep.mubr.bf16.mxu0 0
    %841 = vmatmul.mubr.bf16.gmra.mrb[0].mxu0 %v728
    %v842 = vpop.f32.mrb[0].mxu0
    %v843 = vadd.f32 %v685, %v842
    %v844 = vpop.f32.mrb[0].mxu0
    %v845 = vpop.f32.mrb[0].mxu0
    %v846 = vadd.f32 %v685, %v845
    %v847 = vpop.f32.mrb[0].mxu0
    %848 = vmatprep.mubr.bf16.mxu0 0
    %849 = vmatmul.mubr.bf16.gmra.mrb[0].mxu0 %v731
    %v850 = vpop.f32.mrb[0].mxu0
    %v851 = vadd.f32 %v685, %v850
    %v852 = vpop.f32.mrb[0].mxu0
    %v853 = vpop.f32.mrb[0].mxu0
    %v854 = vadd.f32 %v685, %v853
    %v855 = vpop.f32.mrb[0].mxu0
    %856 = vmatprep.mubr.bf16.mxu0 0
    %857 = vmatmul.mubr.bf16.gmra.mrb[0].mxu0 %v734
    %v858 = vpop.f32.mrb[0].mxu0
    %v859 = vadd.f32 %v685, %v858
    %v860 = vpop.f32.mrb[0].mxu0
    %v861 = vpop.f32.mrb[0].mxu0
    %v862 = vadd.f32 %v685, %v861
    %v863 = vpop.f32.mrb[0].mxu0
    %864 = vdwg.mxu0
    %v865 = vld [vmem:[%s4] sm:$0xf]
    %v866 = vld [vmem:[%s4 + $0x4] sm:$0xf]
    %v867 = vld [vmem:[%s4 + $0x8] sm:$0xf]
    %v868 = vld [vmem:[%s4 + $0xc] sm:$0xf]
    %v873 = vunpack.c.l.b16 %v865
    %v874 = vunpack.c.l.b16 %v866
    %v875 = vunpack.c.l.b16 %v867
    %v876 = vunpack.c.l.b16 %v868
    %v877 = vpack.c.b16 %v874, %v873
    %v878 = vpack.c.b16 %v876, %v875
    %881 = vmatprep.subr.bf16.mxu0 0
    %882 = vmatpush1.bf16.msra.mxu0 %v877
    %883 = vmatprep.subr.bf16.mxu0 0
    %884 = vmatpush1.bf16.msra.mxu0 %v878
    %885 = vmatprep.subr.bf16.mxu0 0
    %886 = vmatpush1.bf16.msra.mxu0 0
    %887 = vmatprep.subr.bf16.mxu0 0
    %888 = vmatpush1.bf16.msra.mxu0 0
    %889 = vmatprep.subr.bf16.mxu0 0
    %890 = vmatpush1.bf16.msra.mxu0 0
    %891 = vmatprep.subr.bf16.mxu0 0
    %892 = vmatpush1.bf16.msra.mxu0 0
    %893 = vmatprep.subr.bf16.mxu0 0
    %894 = vmatpush1.bf16.msra.mxu0 0
    %895 = vmatprep.subr.bf16.mxu0 0
    %896 = vmatpush1.bf16.msra.mxu0 0
    %897 = vmatprep.subr.bf16.mxu0 0
    %898 = vmatpush1.bf16.msra.mxu0 0
    %899 = vmatprep.subr.bf16.mxu0 0
    %900 = vmatpush1.bf16.msra.mxu0 0
    %901 = vmatprep.subr.bf16.mxu0 0
    %902 = vmatpush1.bf16.msra.mxu0 0
    %903 = vmatprep.subr.bf16.mxu0 0
    %904 = vmatpush1.bf16.msra.mxu0 0
    %905 = vmatprep.subr.bf16.mxu0 0
    %906 = vmatpush1.bf16.msra.mxu0 0
    %907 = vmatprep.subr.bf16.mxu0 0
    %908 = vmatpush1.bf16.msra.mxu0 0
    %909 = vmatprep.subr.bf16.mxu0 0
    %910 = vmatpush1.bf16.msra.mxu0 0
    %911 = vmatprep.subr.bf16.mxu0 0
    %912 = vmatpush1.bf16.msra.mxu0 0
    %913 = vmatprep.mubr.bf16.mxu0 0
    %914 = vmatmul.mubr.bf16.gmra.mrb[0].mxu0 %v701
    %v915 = vpop.f32.mrb[0].mxu0
    %v916 = vadd.f32 0.0, %v915
    %v917 = vpop.f32.mrb[0].mxu0
    %v918 = vpop.f32.mrb[0].mxu0
    %v919 = vadd.f32 0.0, %v918
    %v920 = vpop.f32.mrb[0].mxu0
    %921 = vmatprep.mubr.bf16.mxu0 0
    %922 = vmatmul.mubr.bf16.gmra.mrb[0].mxu0 %v704
    %v923 = vpop.f32.mrb[0].mxu0
    %v924 = vadd.f32 0.0, %v923
    %v925 = vpop.f32.mrb[0].mxu0
    %v926 = vpop.f32.mrb[0].mxu0
    %v927 = vadd.f32 0.0, %v926
    %v928 = vpop.f32.mrb[0].mxu0
    %929 = vmatprep.mubr.bf16.mxu0 0
    %930 = vmatmul.mubr.bf16.gmra.mrb[0].mxu0 %v707
    %v931 = vpop.f32.mrb[0].mxu0
    %v932 = vadd.f32 0.0, %v931
    %v933 = vpop.f32.mrb[0].mxu0
    %v934 = vpop.f32.mrb[0].mxu0
    %v935 = vadd.f32 0.0, %v934
    %v936 = vpop.f32.mrb[0].mxu0
    %937 = vmatprep.mubr.bf16.mxu0 0
    %938 = vmatmul.mubr.bf16.gmra.mrb[0].mxu0 %v710
    %v939 = vpop.f32.mrb[0].mxu0
    %v940 = vadd.f32 0.0, %v939
    %v941 = vpop.f32.mrb[0].mxu0
    %v942 = vpop.f32.mrb[0].mxu0
    %v943 = vadd.f32 0.0, %v942
    %v944 = vpop.f32.mrb[0].mxu0
    %945 = vmatprep.mubr.bf16.mxu0 0
    %946 = vmatmul.mubr.bf16.gmra.mrb[0].mxu0 %v713
    %v947 = vpop.f32.mrb[0].mxu0
    %v948 = vadd.f32 0.0, %v947
    %v949 = vpop.f32.mrb[0].mxu0
    %v950 = vpop.f32.mrb[0].mxu0
    %v951 = vadd.f32 0.0, %v950
    %v952 = vpop.f32.mrb[0].mxu0
    %953 = vmatprep.mubr.bf16.mxu0 0
    %954 = vmatmul.mubr.bf16.gmra.mrb[0].mxu0 %v716
    %v955 = vpop.f32.mrb[0].mxu0
    %v956 = vadd.f32 0.0, %v955
    %v957 = vpop.f32.mrb[0].mxu0
    %v958 = vpop.f32.mrb[0].mxu0
    %v959 = vadd.f32 0.0, %v958
    %v960 = vpop.f32.mrb[0].mxu0
    %961 = vmatprep.mubr.bf16.mxu0 0
    %962 = vmatmul.mubr.bf16.gmra.mrb[0].mxu0 %v719
    %v963 = vpop.f32.mrb[0].mxu0
    %v964 = vadd.f32 0.0, %v963
    %v965 = vpop.f32.mrb[0].mxu0
    %v966 = vpop.f32.mrb[0].mxu0
    %v967 = vadd.f32 0.0, %v966
    %v968 = vpop.f32.mrb[0].mxu0
    %969 = vmatprep.mubr.bf16.mxu0 0
    %970 = vmatmul.mubr.bf16.gmra.mrb[0].mxu0 %v722
    %v971 = vpop.f32.mrb[0].mxu0
    %v972 = vadd.f32 0.0, %v971
    %v973 = vpop.f32.mrb[0].mxu0
    %v974 = vpop.f32.mrb[0].mxu0
    %v975 = vadd.f32 0.0, %v974
    %v976 = vpop.f32.mrb[0].mxu0
    %977 = vmatprep.mubr.bf16.mxu0 0
    %978 = vmatmul.mubr.bf16.gmra.mrb[0].mxu0 %v725
    %v979 = vpop.f32.mrb[0].mxu0
    %v980 = vadd.f32 0.0, %v979
    %v981 = vpop.f32.mrb[0].mxu0
    %v982 = vpop.f32.mrb[0].mxu0
    %v983 = vadd.f32 0.0, %v982
    %v984 = vpop.f32.mrb[0].mxu0
    %985 = vdwg.mxu0
    %s986 = scalar_lea.vmem %s4, 32
    %v987 = vld [vmem:[%s986] sm:$0xf]
    %v988 = vld [vmem:[%s986 + $0x4] sm:$0xf]
    %v989 = vld [vmem:[%s986 + $0x8] sm:$0xf]
    %v990 = vld [vmem:[%s986 + $0xc] sm:$0xf]
    %v995 = vunpack.c.l.b16 %v987
    %v996 = vunpack.c.l.b16 %v988
    %v997 = vunpack.c.l.b16 %v989
    %v998 = vunpack.c.l.b16 %v990
    %v999 = vpack.c.b16 %v996, %v995
    %v1000 = vpack.c.b16 %v998, %v997
    %1003 = vmatprep.subr.bf16.mxu0 0
    %1004 = vmatpush1.bf16.msra.mxu0 %v999
    %1005 = vmatprep.subr.bf16.mxu0 0
    %1006 = vmatpush1.bf16.msra.mxu0 %v1000
    %1007 = vmatprep.subr.bf16.mxu0 0
    %1008 = vmatpush1.bf16.msra.mxu0 0
    %1009 = vmatprep.subr.bf16.mxu0 0
    %1010 = vmatpush1.bf16.msra.mxu0 0
    %1011 = vmatprep.subr.bf16.mxu0 0
    %1012 = vmatpush1.bf16.msra.mxu0 0
    %1013 = vmatprep.subr.bf16.mxu0 0
    %1014 = vmatpush1.bf16.msra.mxu0 0
    %1015 = vmatprep.subr.bf16.mxu0 0
    %1016 = vmatpush1.bf16.msra.mxu0 0
    %1017 = vmatprep.subr.bf16.mxu0 0
    %1018 = vmatpush1.bf16.msra.mxu0 0
    %1019 = vmatprep.subr.bf16.mxu0 0
    %1020 = vmatpush1.bf16.msra.mxu0 0
    %1021 = vmatprep.subr.bf16.mxu0 0
    %1022 = vmatpush1.bf16.msra.mxu0 0
    %1023 = vmatprep.subr.bf16.mxu0 0
    %1024 = vmatpush1.bf16.msra.mxu0 0
    %1025 = vmatprep.subr.bf16.mxu0 0
    %1026 = vmatpush1.bf16.msra.mxu0 0
    %1027 = vmatprep.subr.bf16.mxu0 0
    %1028 = vmatpush1.bf16.msra.mxu0 0
    %1029 = vmatprep.subr.bf16.mxu0 0
    %1030 = vmatpush1.bf16.msra.mxu0 0
    %1031 = vmatprep.subr.bf16.mxu0 0
    %1032 = vmatpush1.bf16.msra.mxu0 0
    %1033 = vmatprep.subr.bf16.mxu0 0
    %1034 = vmatpush1.bf16.msra.mxu0 0
    %1035 = vmatprep.mubr.bf16.mxu0 0
    %1036 = vmatmul.mubr.bf16.gmra.mrb[0].mxu0 %v710
    %v1037 = vpop.f32.mrb[0].mxu0
    %v1038 = vadd.f32 0.0, %v1037
    %v1039 = vpop.f32.mrb[0].mxu0
    %v1040 = vpop.f32.mrb[0].mxu0
    %v1041 = vadd.f32 0.0, %v1040
    %v1042 = vpop.f32.mrb[0].mxu0
    %1043 = vmatprep.mubr.bf16.mxu0 0
    %1044 = vmatmul.mubr.bf16.gmra.mrb[0].mxu0 %v713
    %v1045 = vpop.f32.mrb[0].mxu0
    %v1046 = vadd.f32 0.0, %v1045
    %v1047 = vpop.f32.mrb[0].mxu0
    %v1048 = vpop.f32.mrb[0].mxu0
    %v1049 = vadd.f32 0.0, %v1048
    %v1050 = vpop.f32.mrb[0].mxu0
    %1051 = vmatprep.mubr.bf16.mxu0 0
    %1052 = vmatmul.mubr.bf16.gmra.mrb[0].mxu0 %v716
    %v1053 = vpop.f32.mrb[0].mxu0
    %v1054 = vadd.f32 0.0, %v1053
    %v1055 = vpop.f32.mrb[0].mxu0
    %v1056 = vpop.f32.mrb[0].mxu0
    %v1057 = vadd.f32 0.0, %v1056
    %v1058 = vpop.f32.mrb[0].mxu0
    %1059 = vmatprep.mubr.bf16.mxu0 0
    %1060 = vmatmul.mubr.bf16.gmra.mrb[0].mxu0 %v719
    %v1061 = vpop.f32.mrb[0].mxu0
    %v1062 = vadd.f32 0.0, %v1061
    %v1063 = vpop.f32.mrb[0].mxu0
    %v1064 = vpop.f32.mrb[0].mxu0
    %v1065 = vadd.f32 0.0, %v1064
    %v1066 = vpop.f32.mrb[0].mxu0
    %1067 = vmatprep.mubr.bf16.mxu0 0
    %1068 = vmatmul.mubr.bf16.gmra.mrb[0].mxu0 %v722
    %v1069 = vpop.f32.mrb[0].mxu0
    %v1070 = vadd.f32 0.0, %v1069
    %v1071 = vpop.f32.mrb[0].mxu0
    %v1072 = vpop.f32.mrb[0].mxu0
    %v1073 = vadd.f32 0.0, %v1072
    %v1074 = vpop.f32.mrb[0].mxu0
    %1075 = vmatprep.mubr.bf16.mxu0 0
    %1076 = vmatmul.mubr.bf16.gmra.mrb[0].mxu0 %v725
    %v1077 = vpop.f32.mrb[0].mxu0
    %v1078 = vadd.f32 0.0, %v1077
    %v1079 = vpop.f32.mrb[0].mxu0
    %v1080 = vpop.f32.mrb[0].mxu0
    %v1081 = vadd.f32 0.0, %v1080
    %v1082 = vpop.f32.mrb[0].mxu0
    %1083 = vmatprep.mubr.bf16.mxu0 0
    %1084 = vmatmul.mubr.bf16.gmra.mrb[0].mxu0 %v728
    %v1085 = vpop.f32.mrb[0].mxu0
    %v1086 = vadd.f32 0.0, %v1085
    %v1087 = vpop.f32.mrb[0].mxu0
    %v1088 = vpop.f32.mrb[0].mxu0
    %v1089 = vadd.f32 0.0, %v1088
    %v1090 = vpop.f32.mrb[0].mxu0
    %1091 = vmatprep.mubr.bf16.mxu0 0
    %1092 = vmatmul.mubr.bf16.gmra.mrb[0].mxu0 %v731
    %v1093 = vpop.f32.mrb[0].mxu0
    %v1094 = vadd.f32 0.0, %v1093
    %v1095 = vpop.f32.mrb[0].mxu0
    %v1096 = vpop.f32.mrb[0].mxu0
    %v1097 = vadd.f32 0.0, %v1096
    %v1098 = vpop.f32.mrb[0].mxu0
    %1099 = vmatprep.mubr.bf16.mxu0 0
    %1100 = vmatmul.mubr.bf16.gmra.mrb[0].mxu0 %v734
    %v1101 = vpop.f32.mrb[0].mxu0
    %v1102 = vadd.f32 0.0, %v1101
    %v1103 = vpop.f32.mrb[0].mxu0
    %v1104 = vpop.f32.mrb[0].mxu0
    %v1105 = vadd.f32 0.0, %v1104
    %v1106 = vpop.f32.mrb[0].mxu0
    %1107 = vdwg.mxu0
    %v1108 = vadd.f32 %v771, 0.0
    %v1109 = vadd.f32 %v774, 0.0
    %v1110 = vadd.f32 %v779, 0.0
    %v1111 = vadd.f32 %v782, 0.0
    %v1112 = vadd.f32 %v787, 0.0
    %v1113 = vadd.f32 %v790, 0.0
    %v1114 = vadd.f32 %v795, %v916
    %v1115 = vadd.f32 %v798, %v919
    %v1116 = vadd.f32 %v803, %v924
    %v1117 = vadd.f32 %v806, %v927
    %v1118 = vadd.f32 %v811, %v932
    %v1119 = vadd.f32 %v814, %v935
    %v1120 = vadd.f32 %v819, %v940
    %v1121 = vadd.f32 %v822, %v943
    %v1122 = vadd.f32 %v827, %v948
    %v1123 = vadd.f32 %v830, %v951
    %v1124 = vadd.f32 %v835, %v956
    %v1125 = vadd.f32 %v838, %v959
    %v1126 = vadd.f32 %v843, %v964
    %v1127 = vadd.f32 %v846, %v967
    %v1128 = vadd.f32 %v851, %v972
    %v1129 = vadd.f32 %v854, %v975
    %v1130 = vadd.f32 %v859, %v980
    %v1131 = vadd.f32 %v862, %v983
    %v1132 = vadd.f32 %v1108, %v1038
    %v1133 = vadd.f32 %v1109, %v1041
    %v1134 = vadd.f32 %v1110, %v1046
    %v1135 = vadd.f32 %v1111, %v1049
    %v1136 = vadd.f32 %v1112, %v1054
    %v1137 = vadd.f32 %v1113, %v1057
    %v1138 = vadd.f32 %v1114, %v1062
    %v1139 = vadd.f32 %v1115, %v1065
    %v1140 = vadd.f32 %v1116, %v1070
    %v1141 = vadd.f32 %v1117, %v1073
    %v1142 = vadd.f32 %v1118, %v1078
    %v1143 = vadd.f32 %v1119, %v1081
    %v1144 = vadd.f32 %v1120, %v1086
    %v1145 = vadd.f32 %v1121, %v1089
    %v1146 = vadd.f32 %v1122, %v1094
    %v1147 = vadd.f32 %v1123, %v1097
    %v1148 = vadd.f32 %v1124, %v1102
    %v1149 = vadd.f32 %v1125, %v1105
    %v1150 = vadd.f32 %v1126, 0.0
    %v1151 = vadd.f32 %v1127, 0.0
    %v1152 = vadd.f32 %v1128, 0.0
    %v1153 = vadd.f32 %v1129, 0.0
    %v1154 = vadd.f32 %v1130, 0.0
    %v1155 = vadd.f32 %v1131, 0.0
    %vm1156 = vcmp.ge.f32.partialorder %v1132, 0.0
    %vm1157 = vcmp.ge.f32.partialorder %v1133, 0.0
    %vm1158 = vcmp.ge.f32.partialorder %v1134, 0.0
    %vm1159 = vcmp.ge.f32.partialorder %v1135, 0.0
    %vm1160 = vcmp.ge.f32.partialorder %v1136, 0.0
    %vm1161 = vcmp.ge.f32.partialorder %v1137, 0.0
    %vm1162 = vcmp.ge.f32.partialorder %v1138, 0.0
    %vm1163 = vcmp.ge.f32.partialorder %v1139, 0.0
    %vm1164 = vcmp.ge.f32.partialorder %v1140, 0.0
    %vm1165 = vcmp.ge.f32.partialorder %v1141, 0.0
    %vm1166 = vcmp.ge.f32.partialorder %v1142, 0.0
    %vm1167 = vcmp.ge.f32.partialorder %v1143, 0.0
    %vm1168 = vcmp.ge.f32.partialorder %v1144, 0.0
    %vm1169 = vcmp.ge.f32.partialorder %v1145, 0.0
    %vm1170 = vcmp.ge.f32.partialorder %v1146, 0.0
    %vm1171 = vcmp.ge.f32.partialorder %v1147, 0.0
    %vm1172 = vcmp.ge.f32.partialorder %v1148, 0.0
    %vm1173 = vcmp.ge.f32.partialorder %v1149, 0.0
    %vm1174 = vcmp.ge.f32.partialorder %v1150, 0.0
    %vm1175 = vcmp.ge.f32.partialorder %v1151, 0.0
    %vm1176 = vcmp.ge.f32.partialorder %v1152, 0.0
    %vm1177 = vcmp.ge.f32.partialorder %v1153, 0.0
    %vm1178 = vcmp.ge.f32.partialorder %v1154, 0.0
    %vm1179 = vcmp.ge.f32.partialorder %v1155, 0.0
    %v1180 = vstv %s56
    %v1181 = vmul.f32 %v1180, %v1132
    %v1182 = vmul.f32 %v1180, %v1133
    %v1183 = vmul.f32 %v1180, %v1134
    %v1184 = vmul.f32 %v1180, %v1135
    %v1185 = vmul.f32 %v1180, %v1136
    %v1186 = vmul.f32 %v1180, %v1137
    %v1187 = vmul.f32 %v1180, %v1138
    %v1188 = vmul.f32 %v1180, %v1139
    %v1189 = vmul.f32 %v1180, %v1140
    %v1190 = vmul.f32 %v1180, %v1141
    %v1191 = vmul.f32 %v1180, %v1142
    %v1192 = vmul.f32 %v1180, %v1143
    %v1193 = vmul.f32 %v1180, %v1144
    %v1194 = vmul.f32 %v1180, %v1145
    %v1195 = vmul.f32 %v1180, %v1146
    %v1196 = vmul.f32 %v1180, %v1147
    %v1197 = vmul.f32 %v1180, %v1148
    %v1198 = vmul.f32 %v1180, %v1149
    %v1199 = vmul.f32 %v1180, %v1150
    %v1200 = vmul.f32 %v1180, %v1151
    %v1201 = vmul.f32 %v1180, %v1152
    %v1202 = vmul.f32 %v1180, %v1153
    %v1203 = vmul.f32 %v1180, %v1154
    %v1204 = vmul.f32 %v1180, %v1155
    %v1205 = vsel %vm1156, %v1132, %v1181
    %v1206 = vsel %vm1157, %v1133, %v1182
    %v1207 = vsel %vm1158, %v1134, %v1183
    %v1208 = vsel %vm1159, %v1135, %v1184
    %v1209 = vsel %vm1160, %v1136, %v1185
    %v1210 = vsel %vm1161, %v1137, %v1186
    %v1211 = vsel %vm1162, %v1138, %v1187
    %v1212 = vsel %vm1163, %v1139, %v1188
    %v1213 = vsel %vm1164, %v1140, %v1189
    %v1214 = vsel %vm1165, %v1141, %v1190
    %v1215 = vsel %vm1166, %v1142, %v1191
    %v1216 = vsel %vm1167, %v1143, %v1192
    %v1217 = vsel %vm1168, %v1144, %v1193
    %v1218 = vsel %vm1169, %v1145, %v1194
    %v1219 = vsel %vm1170, %v1146, %v1195
    %v1220 = vsel %vm1171, %v1147, %v1196
    %v1221 = vsel %vm1172, %v1148, %v1197
    %v1222 = vsel %vm1173, %v1149, %v1198
    %v1223 = vsel %vm1174, %v1150, %v1199
    %v1224 = vsel %vm1175, %v1151, %v1200
    %v1225 = vsel %vm1176, %v1152, %v1201
    %v1226 = vsel %vm1177, %v1153, %v1202
    %v1227 = vsel %vm1178, %v1154, %v1203
    %v1228 = vsel %vm1179, %v1155, %v1204
    %v1229 = vpack.c.bf16 %v1206, %v1205
    %v1230 = vpack.c.bf16 %v1208, %v1207
    %v1231 = vpack.c.bf16 %v1210, %v1209
    %v1232 = vpack.c.bf16 %v1212, %v1211
    %v1233 = vpack.c.bf16 %v1214, %v1213
    %v1234 = vpack.c.bf16 %v1216, %v1215
    %v1235 = vpack.c.bf16 %v1218, %v1217
    %v1236 = vpack.c.bf16 %v1220, %v1219
    %v1237 = vpack.c.bf16 %v1222, %v1221
    %v1238 = vpack.c.bf16 %v1224, %v1223
    %v1239 = vpack.c.bf16 %v1226, %v1225
    %v1240 = vpack.c.bf16 %v1228, %v1227
    %s1241 = scalar_lea.vmem %s6, 16
    %v1242 = vld [vmem:[%s1241] sm:$0xf]
    %v1243 = vld [vmem:[%s1241 + $0x4] sm:$0xf]
    %v1244 = vld [vmem:[%s1241 + $0x8] sm:$0xf]
    %v1245 = vld [vmem:[%s1241 + $0xc] sm:$0xf]
    %v1246 = vld [vmem:[%s7] sm:$0x1]
    %v1248 = vlaneseq
    %v1249 = vshrl.u32 %v1248, 7
    %v1250 = vsub.s32 0, %v1249
    %v1251 = vrot.slane %v1246, %v1250
    %v1257 = vunpack.c.l.b16 %v1242
    %v1258 = vunpack.c.l.b16 %v1243
    %v1259 = vunpack.c.l.b16 %v1244
    %v1260 = vunpack.c.l.b16 %v1245
    %v1261 = vpack.c.b16 %v1258, %v1257
    %v1262 = vpack.c.b16 %v1260, %v1259
    %v1266 = vsel %vm699, %v1229, 0
    %v1269 = vsel %vm699, %v1230, 0
    %v1272 = vsel %vm699, %v1231, 0
    %v1275 = vsel %vm699, %v1232, 0
    %v1278 = vsel %vm699, %v1233, 0
    %v1281 = vsel %vm699, %v1234, 0
    %v1284 = vsel %vm699, %v1235, 0
    %v1287 = vsel %vm699, %v1236, 0
    %v1290 = vsel %vm699, %v1237, 0
    %v1293 = vsel %vm699, %v1238, 0
    %v1296 = vsel %vm699, %v1239, 0
    %v1299 = vsel %vm699, %v1240, 0
    %1301 = vmatprep.subr.bf16.mxu0 0
    %1302 = vmatpush1.bf16.msra.mxu0 %v1261
    %1303 = vmatprep.subr.bf16.mxu0 0
    %1304 = vmatpush1.bf16.msra.mxu0 %v1262
    %1305 = vmatprep.subr.bf16.mxu0 0
    %1306 = vmatpush1.bf16.msra.mxu0 0
    %1307 = vmatprep.subr.bf16.mxu0 0
    %1308 = vmatpush1.bf16.msra.mxu0 0
    %1309 = vmatprep.subr.bf16.mxu0 0
    %1310 = vmatpush1.bf16.msra.mxu0 0
    %1311 = vmatprep.subr.bf16.mxu0 0
    %1312 = vmatpush1.bf16.msra.mxu0 0
    %1313 = vmatprep.subr.bf16.mxu0 0
    %1314 = vmatpush1.bf16.msra.mxu0 0
    %1315 = vmatprep.subr.bf16.mxu0 0
    %1316 = vmatpush1.bf16.msra.mxu0 0
    %1317 = vmatprep.subr.bf16.mxu0 0
    %1318 = vmatpush1.bf16.msra.mxu0 0
    %1319 = vmatprep.subr.bf16.mxu0 0
    %1320 = vmatpush1.bf16.msra.mxu0 0
    %1321 = vmatprep.subr.bf16.mxu0 0
    %1322 = vmatpush1.bf16.msra.mxu0 0
    %1323 = vmatprep.subr.bf16.mxu0 0
    %1324 = vmatpush1.bf16.msra.mxu0 0
    %1325 = vmatprep.subr.bf16.mxu0 0
    %1326 = vmatpush1.bf16.msra.mxu0 0
    %1327 = vmatprep.subr.bf16.mxu0 0
    %1328 = vmatpush1.bf16.msra.mxu0 0
    %1329 = vmatprep.subr.bf16.mxu0 0
    %1330 = vmatpush1.bf16.msra.mxu0 0
    %1331 = vmatprep.subr.bf16.mxu0 0
    %1332 = vmatpush1.bf16.msra.mxu0 0
    %1333 = vmatprep.mubr.bf16.mxu0 0
    %1334 = vmatmul.mubr.bf16.gmra.mrb[0].mxu0 %v1266
    %v1335 = vpop.f32.mrb[0].mxu0
    %v1336 = vadd.f32 %v1251, %v1335
    %v1337 = vpop.f32.mrb[0].mxu0
    %v1338 = vpop.f32.mrb[0].mxu0
    %v1339 = vadd.f32 %v1251, %v1338
    %v1340 = vpop.f32.mrb[0].mxu0
    %1341 = vmatprep.mubr.bf16.mxu0 0
    %1342 = vmatmul.mubr.bf16.gmra.mrb[0].mxu0 %v1269
    %v1343 = vpop.f32.mrb[0].mxu0
    %v1344 = vadd.f32 %v1251, %v1343
    %v1345 = vpop.f32.mrb[0].mxu0
    %v1346 = vpop.f32.mrb[0].mxu0
    %v1347 = vadd.f32 %v1251, %v1346
    %v1348 = vpop.f32.mrb[0].mxu0
    %1349 = vmatprep.mubr.bf16.mxu0 0
    %1350 = vmatmul.mubr.bf16.gmra.mrb[0].mxu0 %v1272
    %v1351 = vpop.f32.mrb[0].mxu0
    %v1352 = vadd.f32 %v1251, %v1351
    %v1353 = vpop.f32.mrb[0].mxu0
    %v1354 = vpop.f32.mrb[0].mxu0
    %v1355 = vadd.f32 %v1251, %v1354
    %v1356 = vpop.f32.mrb[0].mxu0
    %1357 = vmatprep.mubr.bf16.mxu0 0
    %1358 = vmatmul.mubr.bf16.gmra.mrb[0].mxu0 %v1275
    %v1359 = vpop.f32.mrb[0].mxu0
    %v1360 = vadd.f32 %v1251, %v1359
    %v1361 = vpop.f32.mrb[0].mxu0
    %v1362 = vpop.f32.mrb[0].mxu0
    %v1363 = vadd.f32 %v1251, %v1362
    %v1364 = vpop.f32.mrb[0].mxu0
    %1365 = vmatprep.mubr.bf16.mxu0 0
    %1366 = vmatmul.mubr.bf16.gmra.mrb[0].mxu0 %v1278
    %v1367 = vpop.f32.mrb[0].mxu0
    %v1368 = vadd.f32 %v1251, %v1367
    %v1369 = vpop.f32.mrb[0].mxu0
    %v1370 = vpop.f32.mrb[0].mxu0
    %v1371 = vadd.f32 %v1251, %v1370
    %v1372 = vpop.f32.mrb[0].mxu0
    %1373 = vmatprep.mubr.bf16.mxu0 0
    %1374 = vmatmul.mubr.bf16.gmra.mrb[0].mxu0 %v1281
    %v1375 = vpop.f32.mrb[0].mxu0
    %v1376 = vadd.f32 %v1251, %v1375
    %v1377 = vpop.f32.mrb[0].mxu0
    %v1378 = vpop.f32.mrb[0].mxu0
    %v1379 = vadd.f32 %v1251, %v1378
    %v1380 = vpop.f32.mrb[0].mxu0
    %1381 = vmatprep.mubr.bf16.mxu0 0
    %1382 = vmatmul.mubr.bf16.gmra.mrb[0].mxu0 %v1284
    %v1383 = vpop.f32.mrb[0].mxu0
    %v1384 = vadd.f32 %v1251, %v1383
    %v1385 = vpop.f32.mrb[0].mxu0
    %v1386 = vpop.f32.mrb[0].mxu0
    %v1387 = vadd.f32 %v1251, %v1386
    %v1388 = vpop.f32.mrb[0].mxu0
    %1389 = vmatprep.mubr.bf16.mxu0 0
    %1390 = vmatmul.mubr.bf16.gmra.mrb[0].mxu0 %v1287
    %v1391 = vpop.f32.mrb[0].mxu0
    %v1392 = vadd.f32 %v1251, %v1391
    %v1393 = vpop.f32.mrb[0].mxu0
    %v1394 = vpop.f32.mrb[0].mxu0
    %v1395 = vadd.f32 %v1251, %v1394
    %v1396 = vpop.f32.mrb[0].mxu0
    %1397 = vmatprep.mubr.bf16.mxu0 0
    %1398 = vmatmul.mubr.bf16.gmra.mrb[0].mxu0 %v1290
    %v1399 = vpop.f32.mrb[0].mxu0
    %v1400 = vadd.f32 %v1251, %v1399
    %v1401 = vpop.f32.mrb[0].mxu0
    %v1402 = vpop.f32.mrb[0].mxu0
    %v1403 = vadd.f32 %v1251, %v1402
    %v1404 = vpop.f32.mrb[0].mxu0
    %1405 = vmatprep.mubr.bf16.mxu0 0
    %1406 = vmatmul.mubr.bf16.gmra.mrb[0].mxu0 %v1293
    %v1407 = vpop.f32.mrb[0].mxu0
    %v1408 = vadd.f32 %v1251, %v1407
    %v1409 = vpop.f32.mrb[0].mxu0
    %v1410 = vpop.f32.mrb[0].mxu0
    %v1411 = vadd.f32 %v1251, %v1410
    %v1412 = vpop.f32.mrb[0].mxu0
    %1413 = vmatprep.mubr.bf16.mxu0 0
    %1414 = vmatmul.mubr.bf16.gmra.mrb[0].mxu0 %v1296
    %v1415 = vpop.f32.mrb[0].mxu0
    %v1416 = vadd.f32 %v1251, %v1415
    %v1417 = vpop.f32.mrb[0].mxu0
    %v1418 = vpop.f32.mrb[0].mxu0
    %v1419 = vadd.f32 %v1251, %v1418
    %v1420 = vpop.f32.mrb[0].mxu0
    %1421 = vmatprep.mubr.bf16.mxu0 0
    %1422 = vmatmul.mubr.bf16.gmra.mrb[0].mxu0 %v1299
    %v1423 = vpop.f32.mrb[0].mxu0
    %v1424 = vadd.f32 %v1251, %v1423
    %v1425 = vpop.f32.mrb[0].mxu0
    %v1426 = vpop.f32.mrb[0].mxu0
    %v1427 = vadd.f32 %v1251, %v1426
    %v1428 = vpop.f32.mrb[0].mxu0
    %1429 = vdwg.mxu0
    %v1430 = vld [vmem:[%s6] sm:$0xf]
    %v1431 = vld [vmem:[%s6 + $0x4] sm:$0xf]
    %v1432 = vld [vmem:[%s6 + $0x8] sm:$0xf]
    %v1433 = vld [vmem:[%s6 + $0xc] sm:$0xf]
    %v1438 = vunpack.c.l.b16 %v1430
    %v1439 = vunpack.c.l.b16 %v1431
    %v1440 = vunpack.c.l.b16 %v1432
    %v1441 = vunpack.c.l.b16 %v1433
    %v1442 = vpack.c.b16 %v1439, %v1438
    %v1443 = vpack.c.b16 %v1441, %v1440
    %1446 = vmatprep.subr.bf16.mxu0 0
    %1447 = vmatpush1.bf16.msra.mxu0 %v1442
    %1448 = vmatprep.subr.bf16.mxu0 0
    %1449 = vmatpush1.bf16.msra.mxu0 %v1443
    %1450 = vmatprep.subr.bf16.mxu0 0
    %1451 = vmatpush1.bf16.msra.mxu0 0
    %1452 = vmatprep.subr.bf16.mxu0 0
    %1453 = vmatpush1.bf16.msra.mxu0 0
    %1454 = vmatprep.subr.bf16.mxu0 0
    %1455 = vmatpush1.bf16.msra.mxu0 0
    %1456 = vmatprep.subr.bf16.mxu0 0
    %1457 = vmatpush1.bf16.msra.mxu0 0
    %1458 = vmatprep.subr.bf16.mxu0 0
    %1459 = vmatpush1.bf16.msra.mxu0 0
    %1460 = vmatprep.subr.bf16.mxu0 0
    %1461 = vmatpush1.bf16.msra.mxu0 0
    %1462 = vmatprep.subr.bf16.mxu0 0
    %1463 = vmatpush1.bf16.msra.mxu0 0
    %1464 = vmatprep.subr.bf16.mxu0 0
    %1465 = vmatpush1.bf16.msra.mxu0 0
    %1466 = vmatprep.subr.bf16.mxu0 0
    %1467 = vmatpush1.bf16.msra.mxu0 0
    %1468 = vmatprep.subr.bf16.mxu0 0
    %1469 = vmatpush1.bf16.msra.mxu0 0
    %1470 = vmatprep.subr.bf16.mxu0 0
    %1471 = vmatpush1.bf16.msra.mxu0 0
    %1472 = vmatprep.subr.bf16.mxu0 0
    %1473 = vmatpush1.bf16.msra.mxu0 0
    %1474 = vmatprep.subr.bf16.mxu0 0
    %1475 = vmatpush1.bf16.msra.mxu0 0
    %1476 = vmatprep.subr.bf16.mxu0 0
    %1477 = vmatpush1.bf16.msra.mxu0 0
    %1478 = vmatprep.mubr.bf16.mxu0 0
    %1479 = vmatmul.mubr.bf16.gmra.mrb[0].mxu0 %v1266
    %v1480 = vpop.f32.mrb[0].mxu0
    %v1481 = vadd.f32 0.0, %v1480
    %v1482 = vpop.f32.mrb[0].mxu0
    %v1483 = vpop.f32.mrb[0].mxu0
    %v1484 = vadd.f32 0.0, %v1483
    %v1485 = vpop.f32.mrb[0].mxu0
    %1486 = vmatprep.mubr.bf16.mxu0 0
    %1487 = vmatmul.mubr.bf16.gmra.mrb[0].mxu0 %v1269
    %v1488 = vpop.f32.mrb[0].mxu0
    %v1489 = vadd.f32 0.0, %v1488
    %v1490 = vpop.f32.mrb[0].mxu0
    %v1491 = vpop.f32.mrb[0].mxu0
    %v1492 = vadd.f32 0.0, %v1491
    %v1493 = vpop.f32.mrb[0].mxu0
    %1494 = vmatprep.mubr.bf16.mxu0 0
    %1495 = vmatmul.mubr.bf16.gmra.mrb[0].mxu0 %v1272
    %v1496 = vpop.f32.mrb[0].mxu0
    %v1497 = vadd.f32 0.0, %v1496
    %v1498 = vpop.f32.mrb[0].mxu0
    %v1499 = vpop.f32.mrb[0].mxu0
    %v1500 = vadd.f32 0.0, %v1499
    %v1501 = vpop.f32.mrb[0].mxu0
    %1502 = vmatprep.mubr.bf16.mxu0 0
    %1503 = vmatmul.mubr.bf16.gmra.mrb[0].mxu0 %v1275
    %v1504 = vpop.f32.mrb[0].mxu0
    %v1505 = vadd.f32 0.0, %v1504
    %v1506 = vpop.f32.mrb[0].mxu0
    %v1507 = vpop.f32.mrb[0].mxu0
    %v1508 = vadd.f32 0.0, %v1507
    %v1509 = vpop.f32.mrb[0].mxu0
    %1510 = vmatprep.mubr.bf16.mxu0 0
    %1511 = vmatmul.mubr.bf16.gmra.mrb[0].mxu0 %v1278
    %v1512 = vpop.f32.mrb[0].mxu0
    %v1513 = vadd.f32 0.0, %v1512
    %v1514 = vpop.f32.mrb[0].mxu0
    %v1515 = vpop.f32.mrb[0].mxu0
    %v1516 = vadd.f32 0.0, %v1515
    %v1517 = vpop.f32.mrb[0].mxu0
    %1518 = vmatprep.mubr.bf16.mxu0 0
    %1519 = vmatmul.mubr.bf16.gmra.mrb[0].mxu0 %v1281
    %v1520 = vpop.f32.mrb[0].mxu0
    %v1521 = vadd.f32 0.0, %v1520
    %v1522 = vpop.f32.mrb[0].mxu0
    %v1523 = vpop.f32.mrb[0].mxu0
    %v1524 = vadd.f32 0.0, %v1523
    %v1525 = vpop.f32.mrb[0].mxu0
    %1526 = vmatprep.mubr.bf16.mxu0 0
    %1527 = vmatmul.mubr.bf16.gmra.mrb[0].mxu0 %v1284
    %v1528 = vpop.f32.mrb[0].mxu0
    %v1529 = vadd.f32 0.0, %v1528
    %v1530 = vpop.f32.mrb[0].mxu0
    %v1531 = vpop.f32.mrb[0].mxu0
    %v1532 = vadd.f32 0.0, %v1531
    %v1533 = vpop.f32.mrb[0].mxu0
    %1534 = vmatprep.mubr.bf16.mxu0 0
    %1535 = vmatmul.mubr.bf16.gmra.mrb[0].mxu0 %v1287
    %v1536 = vpop.f32.mrb[0].mxu0
    %v1537 = vadd.f32 0.0, %v1536
    %v1538 = vpop.f32.mrb[0].mxu0
    %v1539 = vpop.f32.mrb[0].mxu0
    %v1540 = vadd.f32 0.0, %v1539
    %v1541 = vpop.f32.mrb[0].mxu0
    %1542 = vmatprep.mubr.bf16.mxu0 0
    %1543 = vmatmul.mubr.bf16.gmra.mrb[0].mxu0 %v1290
    %v1544 = vpop.f32.mrb[0].mxu0
    %v1545 = vadd.f32 0.0, %v1544
    %v1546 = vpop.f32.mrb[0].mxu0
    %v1547 = vpop.f32.mrb[0].mxu0
    %v1548 = vadd.f32 0.0, %v1547
    %v1549 = vpop.f32.mrb[0].mxu0
    %1550 = vdwg.mxu0
    %s1551 = scalar_lea.vmem %s6, 32
    %v1552 = vld [vmem:[%s1551] sm:$0xf]
    %v1553 = vld [vmem:[%s1551 + $0x4] sm:$0xf]
    %v1554 = vld [vmem:[%s1551 + $0x8] sm:$0xf]
    %v1555 = vld [vmem:[%s1551 + $0xc] sm:$0xf]
    %v1560 = vunpack.c.l.b16 %v1552
    %v1561 = vunpack.c.l.b16 %v1553
    %v1562 = vunpack.c.l.b16 %v1554
    %v1563 = vunpack.c.l.b16 %v1555
    %v1564 = vpack.c.b16 %v1561, %v1560
    %v1565 = vpack.c.b16 %v1563, %v1562
    %1568 = vmatprep.subr.bf16.mxu0 0
    %1569 = vmatpush1.bf16.msra.mxu0 %v1564
    %1570 = vmatprep.subr.bf16.mxu0 0
    %1571 = vmatpush1.bf16.msra.mxu0 %v1565
    %1572 = vmatprep.subr.bf16.mxu0 0
    %1573 = vmatpush1.bf16.msra.mxu0 0
    %1574 = vmatprep.subr.bf16.mxu0 0
    %1575 = vmatpush1.bf16.msra.mxu0 0
    %1576 = vmatprep.subr.bf16.mxu0 0
    %1577 = vmatpush1.bf16.msra.mxu0 0
    %1578 = vmatprep.subr.bf16.mxu0 0
    %1579 = vmatpush1.bf16.msra.mxu0 0
    %1580 = vmatprep.subr.bf16.mxu0 0
    %1581 = vmatpush1.bf16.msra.mxu0 0
    %1582 = vmatprep.subr.bf16.mxu0 0
    %1583 = vmatpush1.bf16.msra.mxu0 0
    %1584 = vmatprep.subr.bf16.mxu0 0
    %1585 = vmatpush1.bf16.msra.mxu0 0
    %1586 = vmatprep.subr.bf16.mxu0 0
    %1587 = vmatpush1.bf16.msra.mxu0 0
    %1588 = vmatprep.subr.bf16.mxu0 0
    %1589 = vmatpush1.bf16.msra.mxu0 0
    %1590 = vmatprep.subr.bf16.mxu0 0
    %1591 = vmatpush1.bf16.msra.mxu0 0
    %1592 = vmatprep.subr.bf16.mxu0 0
    %1593 = vmatpush1.bf16.msra.mxu0 0
    %1594 = vmatprep.subr.bf16.mxu0 0
    %1595 = vmatpush1.bf16.msra.mxu0 0
    %1596 = vmatprep.subr.bf16.mxu0 0
    %1597 = vmatpush1.bf16.msra.mxu0 0
    %1598 = vmatprep.subr.bf16.mxu0 0
    %1599 = vmatpush1.bf16.msra.mxu0 0
    %1600 = vmatprep.mubr.bf16.mxu0 0
    %1601 = vmatmul.mubr.bf16.gmra.mrb[0].mxu0 %v1275
    %v1602 = vpop.f32.mrb[0].mxu0
    %v1603 = vadd.f32 0.0, %v1602
    %v1604 = vpop.f32.mrb[0].mxu0
    %v1605 = vpop.f32.mrb[0].mxu0
    %v1606 = vadd.f32 0.0, %v1605
    %v1607 = vpop.f32.mrb[0].mxu0
    %1608 = vmatprep.mubr.bf16.mxu0 0
    %1609 = vmatmul.mubr.bf16.gmra.mrb[0].mxu0 %v1278
    %v1610 = vpop.f32.mrb[0].mxu0
    %v1611 = vadd.f32 0.0, %v1610
    %v1612 = vpop.f32.mrb[0].mxu0
    %v1613 = vpop.f32.mrb[0].mxu0
    %v1614 = vadd.f32 0.0, %v1613
    %v1615 = vpop.f32.mrb[0].mxu0
    %1616 = vmatprep.mubr.bf16.mxu0 0
    %1617 = vmatmul.mubr.bf16.gmra.mrb[0].mxu0 %v1281
    %v1618 = vpop.f32.mrb[0].mxu0
    %v1619 = vadd.f32 0.0, %v1618
    %v1620 = vpop.f32.mrb[0].mxu0
    %v1621 = vpop.f32.mrb[0].mxu0
    %v1622 = vadd.f32 0.0, %v1621
    %v1623 = vpop.f32.mrb[0].mxu0
    %1624 = vmatprep.mubr.bf16.mxu0 0
    %1625 = vmatmul.mubr.bf16.gmra.mrb[0].mxu0 %v1284
    %v1626 = vpop.f32.mrb[0].mxu0
    %v1627 = vadd.f32 0.0, %v1626
    %v1628 = vpop.f32.mrb[0].mxu0
    %v1629 = vpop.f32.mrb[0].mxu0
    %v1630 = vadd.f32 0.0, %v1629
    %v1631 = vpop.f32.mrb[0].mxu0
    %1632 = vmatprep.mubr.bf16.mxu0 0
    %1633 = vmatmul.mubr.bf16.gmra.mrb[0].mxu0 %v1287
    %v1634 = vpop.f32.mrb[0].mxu0
    %v1635 = vadd.f32 0.0, %v1634
    %v1636 = vpop.f32.mrb[0].mxu0
    %v1637 = vpop.f32.mrb[0].mxu0
    %v1638 = vadd.f32 0.0, %v1637
    %v1639 = vpop.f32.mrb[0].mxu0
    %1640 = vmatprep.mubr.bf16.mxu0 0
    %1641 = vmatmul.mubr.bf16.gmra.mrb[0].mxu0 %v1290
    %v1642 = vpop.f32.mrb[0].mxu0
    %v1643 = vadd.f32 0.0, %v1642
    %v1644 = vpop.f32.mrb[0].mxu0
    %v1645 = vpop.f32.mrb[0].mxu0
    %v1646 = vadd.f32 0.0, %v1645
    %v1647 = vpop.f32.mrb[0].mxu0
    %1648 = vmatprep.mubr.bf16.mxu0 0
    %1649 = vmatmul.mubr.bf16.gmra.mrb[0].mxu0 %v1293
    %v1650 = vpop.f32.mrb[0].mxu0
    %v1651 = vadd.f32 0.0, %v1650
    %v1652 = vpop.f32.mrb[0].mxu0
    %v1653 = vpop.f32.mrb[0].mxu0
    %v1654 = vadd.f32 0.0, %v1653
    %v1655 = vpop.f32.mrb[0].mxu0
    %1656 = vmatprep.mubr.bf16.mxu0 0
    %1657 = vmatmul.mubr.bf16.gmra.mrb[0].mxu0 %v1296
    %v1658 = vpop.f32.mrb[0].mxu0
    %v1659 = vadd.f32 0.0, %v1658
    %v1660 = vpop.f32.mrb[0].mxu0
    %v1661 = vpop.f32.mrb[0].mxu0
    %v1662 = vadd.f32 0.0, %v1661
    %v1663 = vpop.f32.mrb[0].mxu0
    %1664 = vmatprep.mubr.bf16.mxu0 0
    %1665 = vmatmul.mubr.bf16.gmra.mrb[0].mxu0 %v1299
    %v1666 = vpop.f32.mrb[0].mxu0
    %v1667 = vadd.f32 0.0, %v1666
    %v1668 = vpop.f32.mrb[0].mxu0
    %v1669 = vpop.f32.mrb[0].mxu0
    %v1670 = vadd.f32 0.0, %v1669
    %v1671 = vpop.f32.mrb[0].mxu0
    %1672 = vdwg.mxu0
    %v1673 = vadd.f32 %v1336, 0.0
    %v1674 = vadd.f32 %v1339, 0.0
    %v1675 = vadd.f32 %v1344, 0.0
    %v1676 = vadd.f32 %v1347, 0.0
    %v1677 = vadd.f32 %v1352, 0.0
    %v1678 = vadd.f32 %v1355, 0.0
    %v1679 = vadd.f32 %v1360, %v1481
    %v1680 = vadd.f32 %v1363, %v1484
    %v1681 = vadd.f32 %v1368, %v1489
    %v1682 = vadd.f32 %v1371, %v1492
    %v1683 = vadd.f32 %v1376, %v1497
    %v1684 = vadd.f32 %v1379, %v1500
    %v1685 = vadd.f32 %v1384, %v1505
    %v1686 = vadd.f32 %v1387, %v1508
    %v1687 = vadd.f32 %v1392, %v1513
    %v1688 = vadd.f32 %v1395, %v1516
    %v1689 = vadd.f32 %v1400, %v1521
    %v1690 = vadd.f32 %v1403, %v1524
    %v1691 = vadd.f32 %v1408, %v1529
    %v1692 = vadd.f32 %v1411, %v1532
    %v1693 = vadd.f32 %v1416, %v1537
    %v1694 = vadd.f32 %v1419, %v1540
    %v1695 = vadd.f32 %v1424, %v1545
    %v1696 = vadd.f32 %v1427, %v1548
    %v1697 = vadd.f32 %v1673, %v1603
    %v1698 = vadd.f32 %v1674, %v1606
    %v1699 = vadd.f32 %v1675, %v1611
    %v1700 = vadd.f32 %v1676, %v1614
    %v1701 = vadd.f32 %v1677, %v1619
    %v1702 = vadd.f32 %v1678, %v1622
    %v1703 = vadd.f32 %v1679, %v1627
    %v1704 = vadd.f32 %v1680, %v1630
    %v1705 = vadd.f32 %v1681, %v1635
    %v1706 = vadd.f32 %v1682, %v1638
    %v1707 = vadd.f32 %v1683, %v1643
    %v1708 = vadd.f32 %v1684, %v1646
    %v1709 = vadd.f32 %v1685, %v1651
    %v1710 = vadd.f32 %v1686, %v1654
    %v1711 = vadd.f32 %v1687, %v1659
    %v1712 = vadd.f32 %v1688, %v1662
    %v1713 = vadd.f32 %v1689, %v1667
    %v1714 = vadd.f32 %v1690, %v1670
    %v1715 = vadd.f32 %v1691, 0.0
    %v1716 = vadd.f32 %v1692, 0.0
    %v1717 = vadd.f32 %v1693, 0.0
    %v1718 = vadd.f32 %v1694, 0.0
    %v1719 = vadd.f32 %v1695, 0.0
    %v1720 = vadd.f32 %v1696, 0.0
    %vm1721 = vcmp.ge.f32.partialorder %v1697, 0.0
    %vm1722 = vcmp.ge.f32.partialorder %v1698, 0.0
    %vm1723 = vcmp.ge.f32.partialorder %v1699, 0.0
    %vm1724 = vcmp.ge.f32.partialorder %v1700, 0.0
    %vm1725 = vcmp.ge.f32.partialorder %v1701, 0.0
    %vm1726 = vcmp.ge.f32.partialorder %v1702, 0.0
    %vm1727 = vcmp.ge.f32.partialorder %v1703, 0.0
    %vm1728 = vcmp.ge.f32.partialorder %v1704, 0.0
    %vm1729 = vcmp.ge.f32.partialorder %v1705, 0.0
    %vm1730 = vcmp.ge.f32.partialorder %v1706, 0.0
    %vm1731 = vcmp.ge.f32.partialorder %v1707, 0.0
    %vm1732 = vcmp.ge.f32.partialorder %v1708, 0.0
    %vm1733 = vcmp.ge.f32.partialorder %v1709, 0.0
    %vm1734 = vcmp.ge.f32.partialorder %v1710, 0.0
    %vm1735 = vcmp.ge.f32.partialorder %v1711, 0.0
    %vm1736 = vcmp.ge.f32.partialorder %v1712, 0.0
    %vm1737 = vcmp.ge.f32.partialorder %v1713, 0.0
    %vm1738 = vcmp.ge.f32.partialorder %v1714, 0.0
    %vm1739 = vcmp.ge.f32.partialorder %v1715, 0.0
    %vm1740 = vcmp.ge.f32.partialorder %v1716, 0.0
    %vm1741 = vcmp.ge.f32.partialorder %v1717, 0.0
    %vm1742 = vcmp.ge.f32.partialorder %v1718, 0.0
    %vm1743 = vcmp.ge.f32.partialorder %v1719, 0.0
    %vm1744 = vcmp.ge.f32.partialorder %v1720, 0.0
    %v1745 = vstv %s57
    %v1746 = vmul.f32 %v1745, %v1697
    %v1747 = vmul.f32 %v1745, %v1698
    %v1748 = vmul.f32 %v1745, %v1699
    %v1749 = vmul.f32 %v1745, %v1700
    %v1750 = vmul.f32 %v1745, %v1701
    %v1751 = vmul.f32 %v1745, %v1702
    %v1752 = vmul.f32 %v1745, %v1703
    %v1753 = vmul.f32 %v1745, %v1704
    %v1754 = vmul.f32 %v1745, %v1705
    %v1755 = vmul.f32 %v1745, %v1706
    %v1756 = vmul.f32 %v1745, %v1707
    %v1757 = vmul.f32 %v1745, %v1708
    %v1758 = vmul.f32 %v1745, %v1709
    %v1759 = vmul.f32 %v1745, %v1710
    %v1760 = vmul.f32 %v1745, %v1711
    %v1761 = vmul.f32 %v1745, %v1712
    %v1762 = vmul.f32 %v1745, %v1713
    %v1763 = vmul.f32 %v1745, %v1714
    %v1764 = vmul.f32 %v1745, %v1715
    %v1765 = vmul.f32 %v1745, %v1716
    %v1766 = vmul.f32 %v1745, %v1717
    %v1767 = vmul.f32 %v1745, %v1718
    %v1768 = vmul.f32 %v1745, %v1719
    %v1769 = vmul.f32 %v1745, %v1720
    %v1770 = vsel %vm1721, %v1697, %v1746
    %v1771 = vsel %vm1722, %v1698, %v1747
    %v1772 = vsel %vm1723, %v1699, %v1748
    %v1773 = vsel %vm1724, %v1700, %v1749
    %v1774 = vsel %vm1725, %v1701, %v1750
    %v1775 = vsel %vm1726, %v1702, %v1751
    %v1776 = vsel %vm1727, %v1703, %v1752
    %v1777 = vsel %vm1728, %v1704, %v1753
    %v1778 = vsel %vm1729, %v1705, %v1754
    %v1779 = vsel %vm1730, %v1706, %v1755
    %v1780 = vsel %vm1731, %v1707, %v1756
    %v1781 = vsel %vm1732, %v1708, %v1757
    %v1782 = vsel %vm1733, %v1709, %v1758
    %v1783 = vsel %vm1734, %v1710, %v1759
    %v1784 = vsel %vm1735, %v1711, %v1760
    %v1785 = vsel %vm1736, %v1712, %v1761
    %v1786 = vsel %vm1737, %v1713, %v1762
    %v1787 = vsel %vm1738, %v1714, %v1763
    %v1788 = vsel %vm1739, %v1715, %v1764
    %v1789 = vsel %vm1740, %v1716, %v1765
    %v1790 = vsel %vm1741, %v1717, %v1766
    %v1791 = vsel %vm1742, %v1718, %v1767
    %v1792 = vsel %vm1743, %v1719, %v1768
    %v1793 = vsel %vm1744, %v1720, %v1769
    %v1794 = vpack.c.bf16 %v1771, %v1770
    %v1795 = vpack.c.bf16 %v1773, %v1772
    %v1796 = vpack.c.bf16 %v1775, %v1774
    %v1797 = vpack.c.bf16 %v1777, %v1776
    %v1798 = vpack.c.bf16 %v1779, %v1778
    %v1799 = vpack.c.bf16 %v1781, %v1780
    %v1800 = vpack.c.bf16 %v1783, %v1782
    %v1801 = vpack.c.bf16 %v1785, %v1784
    %v1802 = vpack.c.bf16 %v1787, %v1786
    %v1803 = vpack.c.bf16 %v1789, %v1788
    %v1804 = vpack.c.bf16 %v1791, %v1790
    %v1805 = vpack.c.bf16 %v1793, %v1792
    %s1806 = scalar_lea.vmem %s8, 16
    %v1807 = vld [vmem:[%s1806] sm:$0xf]
    %v1808 = vld [vmem:[%s1806 + $0x4] sm:$0xf]
    %v1809 = vld [vmem:[%s1806 + $0x8] sm:$0xf]
    %v1810 = vld [vmem:[%s1806 + $0xc] sm:$0xf]
    %v1811 = vld [vmem:[%s9] sm:$0x1]
    %v1813 = vlaneseq
    %v1814 = vshrl.u32 %v1813, 7
    %v1815 = vsub.s32 0, %v1814
    %v1816 = vrot.slane %v1811, %v1815
    %v1822 = vunpack.c.l.b16 %v1807
    %v1823 = vunpack.c.l.b16 %v1808
    %v1824 = vunpack.c.l.b16 %v1809
    %v1825 = vunpack.c.l.b16 %v1810
    %v1826 = vpack.c.b16 %v1823, %v1822
    %v1827 = vpack.c.b16 %v1825, %v1824
    %v1831 = vsel %vm699, %v1794, 0
    %v1834 = vsel %vm699, %v1795, 0
    %v1837 = vsel %vm699, %v1796, 0
    %v1840 = vsel %vm699, %v1797, 0
    %v1843 = vsel %vm699, %v1798, 0
    %v1846 = vsel %vm699, %v1799, 0
    %v1849 = vsel %vm699, %v1800, 0
    %v1852 = vsel %vm699, %v1801, 0
    %v1855 = vsel %vm699, %v1802, 0
    %v1858 = vsel %vm699, %v1803, 0
    %v1861 = vsel %vm699, %v1804, 0
    %v1864 = vsel %vm699, %v1805, 0
    %1866 = vmatprep.subr.bf16.mxu0 0
    %1867 = vmatpush1.bf16.msra.mxu0 %v1826
    %1868 = vmatprep.subr.bf16.mxu0 0
    %1869 = vmatpush1.bf16.msra.mxu0 %v1827
    %1870 = vmatprep.subr.bf16.mxu0 0
    %1871 = vmatpush1.bf16.msra.mxu0 0
    %1872 = vmatprep.subr.bf16.mxu0 0
    %1873 = vmatpush1.bf16.msra.mxu0 0
    %1874 = vmatprep.subr.bf16.mxu0 0
    %1875 = vmatpush1.bf16.msra.mxu0 0
    %1876 = vmatprep.subr.bf16.mxu0 0
    %1877 = vmatpush1.bf16.msra.mxu0 0
    %1878 = vmatprep.subr.bf16.mxu0 0
    %1879 = vmatpush1.bf16.msra.mxu0 0
    %1880 = vmatprep.subr.bf16.mxu0 0
    %1881 = vmatpush1.bf16.msra.mxu0 0
    %1882 = vmatprep.subr.bf16.mxu0 0
    %1883 = vmatpush1.bf16.msra.mxu0 0
    %1884 = vmatprep.subr.bf16.mxu0 0
    %1885 = vmatpush1.bf16.msra.mxu0 0
    %1886 = vmatprep.subr.bf16.mxu0 0
    %1887 = vmatpush1.bf16.msra.mxu0 0
    %1888 = vmatprep.subr.bf16.mxu0 0
    %1889 = vmatpush1.bf16.msra.mxu0 0
    %1890 = vmatprep.subr.bf16.mxu0 0
    %1891 = vmatpush1.bf16.msra.mxu0 0
    %1892 = vmatprep.subr.bf16.mxu0 0
    %1893 = vmatpush1.bf16.msra.mxu0 0
    %1894 = vmatprep.subr.bf16.mxu0 0
    %1895 = vmatpush1.bf16.msra.mxu0 0
    %1896 = vmatprep.subr.bf16.mxu0 0
    %1897 = vmatpush1.bf16.msra.mxu0 0
    %1898 = vmatprep.mubr.bf16.mxu0 0
    %1899 = vmatmul.mubr.bf16.gmra.mrb[0].mxu0 %v1831
    %v1900 = vpop.f32.mrb[0].mxu0
    %v1901 = vadd.f32 %v1816, %v1900
    %v1902 = vpop.f32.mrb[0].mxu0
    %v1903 = vpop.f32.mrb[0].mxu0
    %v1904 = vadd.f32 %v1816, %v1903
    %v1905 = vpop.f32.mrb[0].mxu0
    %1906 = vmatprep.mubr.bf16.mxu0 0
    %1907 = vmatmul.mubr.bf16.gmra.mrb[0].mxu0 %v1834
    %v1908 = vpop.f32.mrb[0].mxu0
    %v1909 = vadd.f32 %v1816, %v1908
    %v1910 = vpop.f32.mrb[0].mxu0
    %v1911 = vpop.f32.mrb[0].mxu0
    %v1912 = vadd.f32 %v1816, %v1911
    %v1913 = vpop.f32.mrb[0].mxu0
    %1914 = vmatprep.mubr.bf16.mxu0 0
    %1915 = vmatmul.mubr.bf16.gmra.mrb[0].mxu0 %v1837
    %v1916 = vpop.f32.mrb[0].mxu0
    %v1917 = vadd.f32 %v1816, %v1916
    %v1918 = vpop.f32.mrb[0].mxu0
    %v1919 = vpop.f32.mrb[0].mxu0
    %v1920 = vadd.f32 %v1816, %v1919
    %v1921 = vpop.f32.mrb[0].mxu0
    %1922 = vmatprep.mubr.bf16.mxu0 0
    %1923 = vmatmul.mubr.bf16.gmra.mrb[0].mxu0 %v1840
    %v1924 = vpop.f32.mrb[0].mxu0
    %v1925 = vadd.f32 %v1816, %v1924
    %v1926 = vpop.f32.mrb[0].mxu0
    %v1927 = vpop.f32.mrb[0].mxu0
    %v1928 = vadd.f32 %v1816, %v1927
    %v1929 = vpop.f32.mrb[0].mxu0
    %1930 = vmatprep.mubr.bf16.mxu0 0
    %1931 = vmatmul.mubr.bf16.gmra.mrb[0].mxu0 %v1843
    %v1932 = vpop.f32.mrb[0].mxu0
    %v1933 = vadd.f32 %v1816, %v1932
    %v1934 = vpop.f32.mrb[0].mxu0
    %v1935 = vpop.f32.mrb[0].mxu0
    %v1936 = vadd.f32 %v1816, %v1935
    %v1937 = vpop.f32.mrb[0].mxu0
    %1938 = vmatprep.mubr.bf16.mxu0 0
    %1939 = vmatmul.mubr.bf16.gmra.mrb[0].mxu0 %v1846
    %v1940 = vpop.f32.mrb[0].mxu0
    %v1941 = vadd.f32 %v1816, %v1940
    %v1942 = vpop.f32.mrb[0].mxu0
    %v1943 = vpop.f32.mrb[0].mxu0
    %v1944 = vadd.f32 %v1816, %v1943
    %v1945 = vpop.f32.mrb[0].mxu0
    %1946 = vmatprep.mubr.bf16.mxu0 0
    %1947 = vmatmul.mubr.bf16.gmra.mrb[0].mxu0 %v1849
    %v1948 = vpop.f32.mrb[0].mxu0
    %v1949 = vadd.f32 %v1816, %v1948
    %v1950 = vpop.f32.mrb[0].mxu0
    %v1951 = vpop.f32.mrb[0].mxu0
    %v1952 = vadd.f32 %v1816, %v1951
    %v1953 = vpop.f32.mrb[0].mxu0
    %1954 = vmatprep.mubr.bf16.mxu0 0
    %1955 = vmatmul.mubr.bf16.gmra.mrb[0].mxu0 %v1852
    %v1956 = vpop.f32.mrb[0].mxu0
    %v1957 = vadd.f32 %v1816, %v1956
    %v1958 = vpop.f32.mrb[0].mxu0
    %v1959 = vpop.f32.mrb[0].mxu0
    %v1960 = vadd.f32 %v1816, %v1959
    %v1961 = vpop.f32.mrb[0].mxu0
    %1962 = vmatprep.mubr.bf16.mxu0 0
    %1963 = vmatmul.mubr.bf16.gmra.mrb[0].mxu0 %v1855
    %v1964 = vpop.f32.mrb[0].mxu0
    %v1965 = vadd.f32 %v1816, %v1964
    %v1966 = vpop.f32.mrb[0].mxu0
    %v1967 = vpop.f32.mrb[0].mxu0
    %v1968 = vadd.f32 %v1816, %v1967
    %v1969 = vpop.f32.mrb[0].mxu0
    %1970 = vmatprep.mubr.bf16.mxu0 0
    %1971 = vmatmul.mubr.bf16.gmra.mrb[0].mxu0 %v1858
    %v1972 = vpop.f32.mrb[0].mxu0
    %v1973 = vadd.f32 %v1816, %v1972
    %v1974 = vpop.f32.mrb[0].mxu0
    %v1975 = vpop.f32.mrb[0].mxu0
    %v1976 = vadd.f32 %v1816, %v1975
    %v1977 = vpop.f32.mrb[0].mxu0
    %1978 = vmatprep.mubr.bf16.mxu0 0
    %1979 = vmatmul.mubr.bf16.gmra.mrb[0].mxu0 %v1861
    %v1980 = vpop.f32.mrb[0].mxu0
    %v1981 = vadd.f32 %v1816, %v1980
    %v1982 = vpop.f32.mrb[0].mxu0
    %v1983 = vpop.f32.mrb[0].mxu0
    %v1984 = vadd.f32 %v1816, %v1983
    %v1985 = vpop.f32.mrb[0].mxu0
    %1986 = vmatprep.mubr.bf16.mxu0 0
    %1987 = vmatmul.mubr.bf16.gmra.mrb[0].mxu0 %v1864
    %v1988 = vpop.f32.mrb[0].mxu0
    %v1989 = vadd.f32 %v1816, %v1988
    %v1990 = vpop.f32.mrb[0].mxu0
    %v1991 = vpop.f32.mrb[0].mxu0
    %v1992 = vadd.f32 %v1816, %v1991
    %v1993 = vpop.f32.mrb[0].mxu0
    %1994 = vdwg.mxu0
    %v1995 = vld [vmem:[%s8] sm:$0xf]
    %v1996 = vld [vmem:[%s8 + $0x4] sm:$0xf]
    %v1997 = vld [vmem:[%s8 + $0x8] sm:$0xf]
    %v1998 = vld [vmem:[%s8 + $0xc] sm:$0xf]
    %v2003 = vunpack.c.l.b16 %v1995
    %v2004 = vunpack.c.l.b16 %v1996
    %v2005 = vunpack.c.l.b16 %v1997
    %v2006 = vunpack.c.l.b16 %v1998
    %v2007 = vpack.c.b16 %v2004, %v2003
    %v2008 = vpack.c.b16 %v2006, %v2005
    %2011 = vmatprep.subr.bf16.mxu0 0
    %2012 = vmatpush1.bf16.msra.mxu0 %v2007
    %2013 = vmatprep.subr.bf16.mxu0 0
    %2014 = vmatpush1.bf16.msra.mxu0 %v2008
    %2015 = vmatprep.subr.bf16.mxu0 0
    %2016 = vmatpush1.bf16.msra.mxu0 0
    %2017 = vmatprep.subr.bf16.mxu0 0
    %2018 = vmatpush1.bf16.msra.mxu0 0
    %2019 = vmatprep.subr.bf16.mxu0 0
    %2020 = vmatpush1.bf16.msra.mxu0 0
    %2021 = vmatprep.subr.bf16.mxu0 0
    %2022 = vmatpush1.bf16.msra.mxu0 0
    %2023 = vmatprep.subr.bf16.mxu0 0
    %2024 = vmatpush1.bf16.msra.mxu0 0
    %2025 = vmatprep.subr.bf16.mxu0 0
    %2026 = vmatpush1.bf16.msra.mxu0 0
    %2027 = vmatprep.subr.bf16.mxu0 0
    %2028 = vmatpush1.bf16.msra.mxu0 0
    %2029 = vmatprep.subr.bf16.mxu0 0
    %2030 = vmatpush1.bf16.msra.mxu0 0
    %2031 = vmatprep.subr.bf16.mxu0 0
    %2032 = vmatpush1.bf16.msra.mxu0 0
    %2033 = vmatprep.subr.bf16.mxu0 0
    %2034 = vmatpush1.bf16.msra.mxu0 0
    %2035 = vmatprep.subr.bf16.mxu0 0
    %2036 = vmatpush1.bf16.msra.mxu0 0
    %2037 = vmatprep.subr.bf16.mxu0 0
    %2038 = vmatpush1.bf16.msra.mxu0 0
    %2039 = vmatprep.subr.bf16.mxu0 0
    %2040 = vmatpush1.bf16.msra.mxu0 0
    %2041 = vmatprep.subr.bf16.mxu0 0
    %2042 = vmatpush1.bf16.msra.mxu0 0
    %2043 = vmatprep.mubr.bf16.mxu0 0
    %2044 = vmatmul.mubr.bf16.gmra.mrb[0].mxu0 %v1831
    %v2045 = vpop.f32.mrb[0].mxu0
    %v2046 = vadd.f32 0.0, %v2045
    %v2047 = vpop.f32.mrb[0].mxu0
    %v2048 = vpop.f32.mrb[0].mxu0
    %v2049 = vadd.f32 0.0, %v2048
    %v2050 = vpop.f32.mrb[0].mxu0
    %2051 = vmatprep.mubr.bf16.mxu0 0
    %2052 = vmatmul.mubr.bf16.gmra.mrb[0].mxu0 %v1834
    %v2053 = vpop.f32.mrb[0].mxu0
    %v2054 = vadd.f32 0.0, %v2053
    %v2055 = vpop.f32.mrb[0].mxu0
    %v2056 = vpop.f32.mrb[0].mxu0
    %v2057 = vadd.f32 0.0, %v2056
    %v2058 = vpop.f32.mrb[0].mxu0
    %2059 = vmatprep.mubr.bf16.mxu0 0
    %2060 = vmatmul.mubr.bf16.gmra.mrb[0].mxu0 %v1837
    %v2061 = vpop.f32.mrb[0].mxu0
    %v2062 = vadd.f32 0.0, %v2061
    %v2063 = vpop.f32.mrb[0].mxu0
    %v2064 = vpop.f32.mrb[0].mxu0
    %v2065 = vadd.f32 0.0, %v2064
    %v2066 = vpop.f32.mrb[0].mxu0
    %2067 = vmatprep.mubr.bf16.mxu0 0
    %2068 = vmatmul.mubr.bf16.gmra.mrb[0].mxu0 %v1840
    %v2069 = vpop.f32.mrb[0].mxu0
    %v2070 = vadd.f32 0.0, %v2069
    %v2071 = vpop.f32.mrb[0].mxu0
    %v2072 = vpop.f32.mrb[0].mxu0
    %v2073 = vadd.f32 0.0, %v2072
    %v2074 = vpop.f32.mrb[0].mxu0
    %2075 = vmatprep.mubr.bf16.mxu0 0
    %2076 = vmatmul.mubr.bf16.gmra.mrb[0].mxu0 %v1843
    %v2077 = vpop.f32.mrb[0].mxu0
    %v2078 = vadd.f32 0.0, %v2077
    %v2079 = vpop.f32.mrb[0].mxu0
    %v2080 = vpop.f32.mrb[0].mxu0
    %v2081 = vadd.f32 0.0, %v2080
    %v2082 = vpop.f32.mrb[0].mxu0
    %2083 = vmatprep.mubr.bf16.mxu0 0
    %2084 = vmatmul.mubr.bf16.gmra.mrb[0].mxu0 %v1846
    %v2085 = vpop.f32.mrb[0].mxu0
    %v2086 = vadd.f32 0.0, %v2085
    %v2087 = vpop.f32.mrb[0].mxu0
    %v2088 = vpop.f32.mrb[0].mxu0
    %v2089 = vadd.f32 0.0, %v2088
    %v2090 = vpop.f32.mrb[0].mxu0
    %2091 = vmatprep.mubr.bf16.mxu0 0
    %2092 = vmatmul.mubr.bf16.gmra.mrb[0].mxu0 %v1849
    %v2093 = vpop.f32.mrb[0].mxu0
    %v2094 = vadd.f32 0.0, %v2093
    %v2095 = vpop.f32.mrb[0].mxu0
    %v2096 = vpop.f32.mrb[0].mxu0
    %v2097 = vadd.f32 0.0, %v2096
    %v2098 = vpop.f32.mrb[0].mxu0
    %2099 = vmatprep.mubr.bf16.mxu0 0
    %2100 = vmatmul.mubr.bf16.gmra.mrb[0].mxu0 %v1852
    %v2101 = vpop.f32.mrb[0].mxu0
    %v2102 = vadd.f32 0.0, %v2101
    %v2103 = vpop.f32.mrb[0].mxu0
    %v2104 = vpop.f32.mrb[0].mxu0
    %v2105 = vadd.f32 0.0, %v2104
    %v2106 = vpop.f32.mrb[0].mxu0
    %2107 = vmatprep.mubr.bf16.mxu0 0
    %2108 = vmatmul.mubr.bf16.gmra.mrb[0].mxu0 %v1855
    %v2109 = vpop.f32.mrb[0].mxu0
    %v2110 = vadd.f32 0.0, %v2109
    %v2111 = vpop.f32.mrb[0].mxu0
    %v2112 = vpop.f32.mrb[0].mxu0
    %v2113 = vadd.f32 0.0, %v2112
    %v2114 = vpop.f32.mrb[0].mxu0
    %2115 = vdwg.mxu0
    %s2116 = scalar_lea.vmem %s8, 32
    %v2117 = vld [vmem:[%s2116] sm:$0xf]
    %v2118 = vld [vmem:[%s2116 + $0x4] sm:$0xf]
    %v2119 = vld [vmem:[%s2116 + $0x8] sm:$0xf]
    %v2120 = vld [vmem:[%s2116 + $0xc] sm:$0xf]
    %v2125 = vunpack.c.l.b16 %v2117
    %v2126 = vunpack.c.l.b16 %v2118
    %v2127 = vunpack.c.l.b16 %v2119
    %v2128 = vunpack.c.l.b16 %v2120
    %v2129 = vpack.c.b16 %v2126, %v2125
    %v2130 = vpack.c.b16 %v2128, %v2127
    %2133 = vmatprep.subr.bf16.mxu0 0
    %2134 = vmatpush1.bf16.msra.mxu0 %v2129
    %2135 = vmatprep.subr.bf16.mxu0 0
    %2136 = vmatpush1.bf16.msra.mxu0 %v2130
    %2137 = vmatprep.subr.bf16.mxu0 0
    %2138 = vmatpush1.bf16.msra.mxu0 0
    %2139 = vmatprep.subr.bf16.mxu0 0
    %2140 = vmatpush1.bf16.msra.mxu0 0
    %2141 = vmatprep.subr.bf16.mxu0 0
    %2142 = vmatpush1.bf16.msra.mxu0 0
    %2143 = vmatprep.subr.bf16.mxu0 0
    %2144 = vmatpush1.bf16.msra.mxu0 0
    %2145 = vmatprep.subr.bf16.mxu0 0
    %2146 = vmatpush1.bf16.msra.mxu0 0
    %2147 = vmatprep.subr.bf16.mxu0 0
    %2148 = vmatpush1.bf16.msra.mxu0 0
    %2149 = vmatprep.subr.bf16.mxu0 0
    %2150 = vmatpush1.bf16.msra.mxu0 0
    %2151 = vmatprep.subr.bf16.mxu0 0
    %2152 = vmatpush1.bf16.msra.mxu0 0
    %2153 = vmatprep.subr.bf16.mxu0 0
    %2154 = vmatpush1.bf16.msra.mxu0 0
    %2155 = vmatprep.subr.bf16.mxu0 0
    %2156 = vmatpush1.bf16.msra.mxu0 0
    %2157 = vmatprep.subr.bf16.mxu0 0
    %2158 = vmatpush1.bf16.msra.mxu0 0
    %2159 = vmatprep.subr.bf16.mxu0 0
    %2160 = vmatpush1.bf16.msra.mxu0 0
    %2161 = vmatprep.subr.bf16.mxu0 0
    %2162 = vmatpush1.bf16.msra.mxu0 0
    %2163 = vmatprep.subr.bf16.mxu0 0
    %2164 = vmatpush1.bf16.msra.mxu0 0
    %2165 = vmatprep.mubr.bf16.mxu0 0
    %2166 = vmatmul.mubr.bf16.gmra.mrb[0].mxu0 %v1840
    %v2167 = vpop.f32.mrb[0].mxu0
    %v2168 = vadd.f32 0.0, %v2167
    %v2169 = vpop.f32.mrb[0].mxu0
    %v2170 = vpop.f32.mrb[0].mxu0
    %v2171 = vadd.f32 0.0, %v2170
    %v2172 = vpop.f32.mrb[0].mxu0
    %2173 = vmatprep.mubr.bf16.mxu0 0
    %2174 = vmatmul.mubr.bf16.gmra.mrb[0].mxu0 %v1843
    %v2175 = vpop.f32.mrb[0].mxu0
    %v2176 = vadd.f32 0.0, %v2175
    %v2177 = vpop.f32.mrb[0].mxu0
    %v2178 = vpop.f32.mrb[0].mxu0
    %v2179 = vadd.f32 0.0, %v2178
    %v2180 = vpop.f32.mrb[0].mxu0
    %2181 = vmatprep.mubr.bf16.mxu0 0
    %2182 = vmatmul.mubr.bf16.gmra.mrb[0].mxu0 %v1846
    %v2183 = vpop.f32.mrb[0].mxu0
    %v2184 = vadd.f32 0.0, %v2183
    %v2185 = vpop.f32.mrb[0].mxu0
    %v2186 = vpop.f32.mrb[0].mxu0
    %v2187 = vadd.f32 0.0, %v2186
    %v2188 = vpop.f32.mrb[0].mxu0
    %2189 = vmatprep.mubr.bf16.mxu0 0
    %2190 = vmatmul.mubr.bf16.gmra.mrb[0].mxu0 %v1849
    %v2191 = vpop.f32.mrb[0].mxu0
    %v2192 = vadd.f32 0.0, %v2191
    %v2193 = vpop.f32.mrb[0].mxu0
    %v2194 = vpop.f32.mrb[0].mxu0
    %v2195 = vadd.f32 0.0, %v2194
    %v2196 = vpop.f32.mrb[0].mxu0
    %2197 = vmatprep.mubr.bf16.mxu0 0
    %2198 = vmatmul.mubr.bf16.gmra.mrb[0].mxu0 %v1852
    %v2199 = vpop.f32.mrb[0].mxu0
    %v2200 = vadd.f32 0.0, %v2199
    %v2201 = vpop.f32.mrb[0].mxu0
    %v2202 = vpop.f32.mrb[0].mxu0
    %v2203 = vadd.f32 0.0, %v2202
    %v2204 = vpop.f32.mrb[0].mxu0
    %2205 = vmatprep.mubr.bf16.mxu0 0
    %2206 = vmatmul.mubr.bf16.gmra.mrb[0].mxu0 %v1855
    %v2207 = vpop.f32.mrb[0].mxu0
    %v2208 = vadd.f32 0.0, %v2207
    %v2209 = vpop.f32.mrb[0].mxu0
    %v2210 = vpop.f32.mrb[0].mxu0
    %v2211 = vadd.f32 0.0, %v2210
    %v2212 = vpop.f32.mrb[0].mxu0
    %2213 = vmatprep.mubr.bf16.mxu0 0
    %2214 = vmatmul.mubr.bf16.gmra.mrb[0].mxu0 %v1858
    %v2215 = vpop.f32.mrb[0].mxu0
    %v2216 = vadd.f32 0.0, %v2215
    %v2217 = vpop.f32.mrb[0].mxu0
    %v2218 = vpop.f32.mrb[0].mxu0
    %v2219 = vadd.f32 0.0, %v2218
    %v2220 = vpop.f32.mrb[0].mxu0
    %2221 = vmatprep.mubr.bf16.mxu0 0
    %2222 = vmatmul.mubr.bf16.gmra.mrb[0].mxu0 %v1861
    %v2223 = vpop.f32.mrb[0].mxu0
    %v2224 = vadd.f32 0.0, %v2223
    %v2225 = vpop.f32.mrb[0].mxu0
    %v2226 = vpop.f32.mrb[0].mxu0
    %v2227 = vadd.f32 0.0, %v2226
    %v2228 = vpop.f32.mrb[0].mxu0
    %2229 = vmatprep.mubr.bf16.mxu0 0
    %2230 = vmatmul.mubr.bf16.gmra.mrb[0].mxu0 %v1864
    %v2231 = vpop.f32.mrb[0].mxu0
    %v2232 = vadd.f32 0.0, %v2231
    %v2233 = vpop.f32.mrb[0].mxu0
    %v2234 = vpop.f32.mrb[0].mxu0
    %v2235 = vadd.f32 0.0, %v2234
    %v2236 = vpop.f32.mrb[0].mxu0
    %2237 = vdwg.mxu0
    %v2238 = vadd.f32 %v1901, 0.0
    %v2239 = vadd.f32 %v1904, 0.0
    %v2240 = vadd.f32 %v1909, 0.0
    %v2241 = vadd.f32 %v1912, 0.0
    %v2242 = vadd.f32 %v1917, 0.0
    %v2243 = vadd.f32 %v1920, 0.0
    %v2244 = vadd.f32 %v1925, %v2046
    %v2245 = vadd.f32 %v1928, %v2049
    %v2246 = vadd.f32 %v1933, %v2054
    %v2247 = vadd.f32 %v1936, %v2057
    %v2248 = vadd.f32 %v1941, %v2062
    %v2249 = vadd.f32 %v1944, %v2065
    %v2250 = vadd.f32 %v1949, %v2070
    %v2251 = vadd.f32 %v1952, %v2073
    %v2252 = vadd.f32 %v1957, %v2078
    %v2253 = vadd.f32 %v1960, %v2081
    %v2254 = vadd.f32 %v1965, %v2086
    %v2255 = vadd.f32 %v1968, %v2089
    %v2256 = vadd.f32 %v1973, %v2094
    %v2257 = vadd.f32 %v1976, %v2097
    %v2258 = vadd.f32 %v1981, %v2102
    %v2259 = vadd.f32 %v1984, %v2105
    %v2260 = vadd.f32 %v1989, %v2110
    %v2261 = vadd.f32 %v1992, %v2113
    %v2262 = vadd.f32 %v2238, %v2168
    %v2263 = vadd.f32 %v2239, %v2171
    %v2264 = vadd.f32 %v2240, %v2176
    %v2265 = vadd.f32 %v2241, %v2179
    %v2266 = vadd.f32 %v2242, %v2184
    %v2267 = vadd.f32 %v2243, %v2187
    %v2268 = vadd.f32 %v2244, %v2192
    %v2269 = vadd.f32 %v2245, %v2195
    %v2270 = vadd.f32 %v2246, %v2200
    %v2271 = vadd.f32 %v2247, %v2203
    %v2272 = vadd.f32 %v2248, %v2208
    %v2273 = vadd.f32 %v2249, %v2211
    %v2274 = vadd.f32 %v2250, %v2216
    %v2275 = vadd.f32 %v2251, %v2219
    %v2276 = vadd.f32 %v2252, %v2224
    %v2277 = vadd.f32 %v2253, %v2227
    %v2278 = vadd.f32 %v2254, %v2232
    %v2279 = vadd.f32 %v2255, %v2235
    %v2280 = vadd.f32 %v2256, 0.0
    %v2281 = vadd.f32 %v2257, 0.0
    %v2282 = vadd.f32 %v2258, 0.0
    %v2283 = vadd.f32 %v2259, 0.0
    %v2284 = vadd.f32 %v2260, 0.0
    %v2285 = vadd.f32 %v2261, 0.0
    %vm2286 = vcmp.ge.f32.partialorder %v2262, 0.0
    %vm2287 = vcmp.ge.f32.partialorder %v2263, 0.0
    %vm2288 = vcmp.ge.f32.partialorder %v2264, 0.0
    %vm2289 = vcmp.ge.f32.partialorder %v2265, 0.0
    %vm2290 = vcmp.ge.f32.partialorder %v2266, 0.0
    %vm2291 = vcmp.ge.f32.partialorder %v2267, 0.0
    %vm2292 = vcmp.ge.f32.partialorder %v2268, 0.0
    %vm2293 = vcmp.ge.f32.partialorder %v2269, 0.0
    %vm2294 = vcmp.ge.f32.partialorder %v2270, 0.0
    %vm2295 = vcmp.ge.f32.partialorder %v2271, 0.0
    %vm2296 = vcmp.ge.f32.partialorder %v2272, 0.0
    %vm2297 = vcmp.ge.f32.partialorder %v2273, 0.0
    %vm2298 = vcmp.ge.f32.partialorder %v2274, 0.0
    %vm2299 = vcmp.ge.f32.partialorder %v2275, 0.0
    %vm2300 = vcmp.ge.f32.partialorder %v2276, 0.0
    %vm2301 = vcmp.ge.f32.partialorder %v2277, 0.0
    %vm2302 = vcmp.ge.f32.partialorder %v2278, 0.0
    %vm2303 = vcmp.ge.f32.partialorder %v2279, 0.0
    %vm2304 = vcmp.ge.f32.partialorder %v2280, 0.0
    %vm2305 = vcmp.ge.f32.partialorder %v2281, 0.0
    %vm2306 = vcmp.ge.f32.partialorder %v2282, 0.0
    %vm2307 = vcmp.ge.f32.partialorder %v2283, 0.0
    %vm2308 = vcmp.ge.f32.partialorder %v2284, 0.0
    %vm2309 = vcmp.ge.f32.partialorder %v2285, 0.0
    %v2310 = vstv %s58
    %v2311 = vmul.f32 %v2310, %v2262
    %v2312 = vmul.f32 %v2310, %v2263
    %v2313 = vmul.f32 %v2310, %v2264
    %v2314 = vmul.f32 %v2310, %v2265
    %v2315 = vmul.f32 %v2310, %v2266
    %v2316 = vmul.f32 %v2310, %v2267
    %v2317 = vmul.f32 %v2310, %v2268
    %v2318 = vmul.f32 %v2310, %v2269
    %v2319 = vmul.f32 %v2310, %v2270
    %v2320 = vmul.f32 %v2310, %v2271
    %v2321 = vmul.f32 %v2310, %v2272
    %v2322 = vmul.f32 %v2310, %v2273
    %v2323 = vmul.f32 %v2310, %v2274
    %v2324 = vmul.f32 %v2310, %v2275
    %v2325 = vmul.f32 %v2310, %v2276
    %v2326 = vmul.f32 %v2310, %v2277
    %v2327 = vmul.f32 %v2310, %v2278
    %v2328 = vmul.f32 %v2310, %v2279
    %v2329 = vmul.f32 %v2310, %v2280
    %v2330 = vmul.f32 %v2310, %v2281
    %v2331 = vmul.f32 %v2310, %v2282
    %v2332 = vmul.f32 %v2310, %v2283
    %v2333 = vmul.f32 %v2310, %v2284
    %v2334 = vmul.f32 %v2310, %v2285
    %v2335 = vsel %vm2286, %v2262, %v2311
    %v2336 = vsel %vm2287, %v2263, %v2312
    %v2337 = vsel %vm2288, %v2264, %v2313
    %v2338 = vsel %vm2289, %v2265, %v2314
    %v2339 = vsel %vm2290, %v2266, %v2315
    %v2340 = vsel %vm2291, %v2267, %v2316
    %v2341 = vsel %vm2292, %v2268, %v2317
    %v2342 = vsel %vm2293, %v2269, %v2318
    %v2343 = vsel %vm2294, %v2270, %v2319
    %v2344 = vsel %vm2295, %v2271, %v2320
    %v2345 = vsel %vm2296, %v2272, %v2321
    %v2346 = vsel %vm2297, %v2273, %v2322
    %v2347 = vsel %vm2298, %v2274, %v2323
    %v2348 = vsel %vm2299, %v2275, %v2324
    %v2349 = vsel %vm2300, %v2276, %v2325
    %v2350 = vsel %vm2301, %v2277, %v2326
    %v2351 = vsel %vm2302, %v2278, %v2327
    %v2352 = vsel %vm2303, %v2279, %v2328
    %v2353 = vsel %vm2304, %v2280, %v2329
    %v2354 = vsel %vm2305, %v2281, %v2330
    %v2355 = vsel %vm2306, %v2282, %v2331
    %v2356 = vsel %vm2307, %v2283, %v2332
    %v2357 = vsel %vm2308, %v2284, %v2333
    %v2358 = vsel %vm2309, %v2285, %v2334
    %v2359 = vpack.c.bf16 %v2336, %v2335
    %v2360 = vpack.c.bf16 %v2338, %v2337
    %v2361 = vpack.c.bf16 %v2340, %v2339
    %v2362 = vpack.c.bf16 %v2342, %v2341
    %v2363 = vpack.c.bf16 %v2344, %v2343
    %v2364 = vpack.c.bf16 %v2346, %v2345
    %v2365 = vpack.c.bf16 %v2348, %v2347
    %v2366 = vpack.c.bf16 %v2350, %v2349
    %v2367 = vpack.c.bf16 %v2352, %v2351
    %v2368 = vpack.c.bf16 %v2354, %v2353
    %v2369 = vpack.c.bf16 %v2356, %v2355
    %v2370 = vpack.c.bf16 %v2358, %v2357
    %v2371 = vld [vmem:[%s10] sm:$0xf]
    %v2372 = vld [vmem:[%s10 + $0x4] sm:$0xf]
    %v2373 = vld [vmem:[%s10 + $0x8] sm:$0xf]
    %v2374 = vld [vmem:[%s10 + $0xc] sm:$0xf]
    %s2375 = scalar_lea.vmem %s10, 16
    %v2376 = vld [vmem:[%s2375] sm:$0xf]
    %v2377 = vld [vmem:[%s2375 + $0x4] sm:$0xf]
    %v2378 = vld [vmem:[%s2375 + $0x8] sm:$0xf]
    %v2379 = vld [vmem:[%s2375 + $0xc] sm:$0xf]
    %v2384 = vunpack.c.l.b16 %v2376
    %v2385 = vunpack.c.l.b16 %v2377
    %v2386 = vunpack.c.l.b16 %v2378
    %v2387 = vunpack.c.l.b16 %v2379
    %v2388 = vpack.c.b16 %v2385, %v2384
    %v2389 = vpack.c.b16 %v2387, %v2386
    %v2393 = vsel %vm699, %v2362, 0
    %v2396 = vsel %vm699, %v2363, 0
    %v2399 = vsel %vm699, %v2364, 0
    %2401 = vmatprep.subr.bf16.mxu0 0
    %2402 = vmatpush1.bf16.msra.mxu0 %v2388
    %2403 = vmatprep.subr.bf16.mxu0 0
    %2404 = vmatpush1.bf16.msra.mxu0 %v2389
    %2405 = vmatprep.subr.bf16.mxu0 0
    %2406 = vmatpush1.bf16.msra.mxu0 0
    %2407 = vmatprep.subr.bf16.mxu0 0
    %2408 = vmatpush1.bf16.msra.mxu0 0
    %2409 = vmatprep.subr.bf16.mxu0 0
    %2410 = vmatpush1.bf16.msra.mxu0 0
    %2411 = vmatprep.subr.bf16.mxu0 0
    %2412 = vmatpush1.bf16.msra.mxu0 0
    %2413 = vmatprep.subr.bf16.mxu0 0
    %2414 = vmatpush1.bf16.msra.mxu0 0
    %2415 = vmatprep.subr.bf16.mxu0 0
    %2416 = vmatpush1.bf16.msra.mxu0 0
    %2417 = vmatprep.subr.bf16.mxu0 0
    %2418 = vmatpush1.bf16.msra.mxu0 0
    %2419 = vmatprep.subr.bf16.mxu0 0
    %2420 = vmatpush1.bf16.msra.mxu0 0
    %2421 = vmatprep.subr.bf16.mxu0 0
    %2422 = vmatpush1.bf16.msra.mxu0 0
    %2423 = vmatprep.subr.bf16.mxu0 0
    %2424 = vmatpush1.bf16.msra.mxu0 0
    %2425 = vmatprep.subr.bf16.mxu0 0
    %2426 = vmatpush1.bf16.msra.mxu0 0
    %2427 = vmatprep.subr.bf16.mxu0 0
    %2428 = vmatpush1.bf16.msra.mxu0 0
    %2429 = vmatprep.subr.bf16.mxu0 0
    %2430 = vmatpush1.bf16.msra.mxu0 0
    %2431 = vmatprep.subr.bf16.mxu0 0
    %2432 = vmatpush1.bf16.msra.mxu0 0
    %2433 = vmatprep.mubr.bf16.mxu0 0
    %2434 = vmatmul.mubr.bf16.gmra.mrb[0].mxu0 %v2393
    %v2435 = vpop.f32.mrb[0].mxu0
    %v2436 = vadd.f32 0.0, %v2435
    %v2437 = vpop.f32.mrb[0].mxu0
    %v2438 = vpop.f32.mrb[0].mxu0
    %v2439 = vadd.f32 0.0, %v2438
    %v2440 = vpop.f32.mrb[0].mxu0
    %2441 = vmatprep.mubr.bf16.mxu0 0
    %2442 = vmatmul.mubr.bf16.gmra.mrb[0].mxu0 %v2396
    %v2443 = vpop.f32.mrb[0].mxu0
    %v2444 = vadd.f32 0.0, %v2443
    %v2445 = vpop.f32.mrb[0].mxu0
    %v2446 = vpop.f32.mrb[0].mxu0
    %v2447 = vadd.f32 0.0, %v2446
    %v2448 = vpop.f32.mrb[0].mxu0
    %2449 = vmatprep.mubr.bf16.mxu0 0
    %2450 = vmatmul.mubr.bf16.gmra.mrb[0].mxu0 %v2399
    %v2451 = vpop.f32.mrb[0].mxu0
    %v2452 = vadd.f32 0.0, %v2451
    %v2453 = vpop.f32.mrb[0].mxu0
    %v2454 = vpop.f32.mrb[0].mxu0
    %v2455 = vadd.f32 0.0, %v2454
    %v2456 = vpop.f32.mrb[0].mxu0
    %2457 = vdwg.mxu0
    %v2462 = vunpack.c.l.b16 %v2371
    %v2463 = vunpack.c.l.b16 %v2372
    %v2464 = vunpack.c.l.b16 %v2373
    %v2465 = vunpack.c.l.b16 %v2374
    %v2466 = vpack.c.b16 %v2463, %v2462
    %v2467 = vpack.c.b16 %v2465, %v2464
    %v2471 = vsel %vm699, %v2359, 0
    %v2474 = vsel %vm699, %v2360, 0
    %v2477 = vsel %vm699, %v2361, 0
    %2479 = vmatprep.subr.bf16.mxu0 0
    %2480 = vmatpush1.bf16.msra.mxu0 %v2466
    %2481 = vmatprep.subr.bf16.mxu0 0
    %2482 = vmatpush1.bf16.msra.mxu0 %v2467
    %2483 = vmatprep.subr.bf16.mxu0 0
    %2484 = vmatpush1.bf16.msra.mxu0 0
    %2485 = vmatprep.subr.bf16.mxu0 0
    %2486 = vmatpush1.bf16.msra.mxu0 0
    %2487 = vmatprep.subr.bf16.mxu0 0
    %2488 = vmatpush1.bf16.msra.mxu0 0
    %2489 = vmatprep.subr.bf16.mxu0 0
    %2490 = vmatpush1.bf16.msra.mxu0 0
    %2491 = vmatprep.subr.bf16.mxu0 0
    %2492 = vmatpush1.bf16.msra.mxu0 0
    %2493 = vmatprep.subr.bf16.mxu0 0
    %2494 = vmatpush1.bf16.msra.mxu0 0
    %2495 = vmatprep.subr.bf16.mxu0 0
    %2496 = vmatpush1.bf16.msra.mxu0 0
    %2497 = vmatprep.subr.bf16.mxu0 0
    %2498 = vmatpush1.bf16.msra.mxu0 0
    %2499 = vmatprep.subr.bf16.mxu0 0
    %2500 = vmatpush1.bf16.msra.mxu0 0
    %2501 = vmatprep.subr.bf16.mxu0 0
    %2502 = vmatpush1.bf16.msra.mxu0 0
    %2503 = vmatprep.subr.bf16.mxu0 0
    %2504 = vmatpush1.bf16.msra.mxu0 0
    %2505 = vmatprep.subr.bf16.mxu0 0
    %2506 = vmatpush1.bf16.msra.mxu0 0
    %2507 = vmatprep.subr.bf16.mxu0 0
    %2508 = vmatpush1.bf16.msra.mxu0 0
    %2509 = vmatprep.subr.bf16.mxu0 0
    %2510 = vmatpush1.bf16.msra.mxu0 0
    %2511 = vmatprep.mubr.bf16.mxu0 0
    %2512 = vmatmul.mubr.bf16.gmra.mrb[0].mxu0 %v2471
    %v2513 = vpop.f32.mrb[0].mxu0
    %v2514 = vadd.f32 %v2436, %v2513
    %v2515 = vpop.f32.mrb[0].mxu0
    %v2516 = vpop.f32.mrb[0].mxu0
    %v2517 = vadd.f32 %v2439, %v2516
    %v2518 = vpop.f32.mrb[0].mxu0
    %2519 = vmatprep.mubr.bf16.mxu0 0
    %2520 = vmatmul.mubr.bf16.gmra.mrb[0].mxu0 %v2474
    %v2521 = vpop.f32.mrb[0].mxu0
    %v2522 = vadd.f32 %v2444, %v2521
    %v2523 = vpop.f32.mrb[0].mxu0
    %v2524 = vpop.f32.mrb[0].mxu0
    %v2525 = vadd.f32 %v2447, %v2524
    %v2526 = vpop.f32.mrb[0].mxu0
    %2527 = vmatprep.mubr.bf16.mxu0 0
    %2528 = vmatmul.mubr.bf16.gmra.mrb[0].mxu0 %v2477
    %v2529 = vpop.f32.mrb[0].mxu0
    %v2530 = vadd.f32 %v2452, %v2529
    %v2531 = vpop.f32.mrb[0].mxu0
    %v2532 = vpop.f32.mrb[0].mxu0
    %v2533 = vadd.f32 %v2455, %v2532
    %v2534 = vpop.f32.mrb[0].mxu0
    %2535 = vdwg.mxu0
    %s2536 = scalar_lea.vmem %s10, 32
    %v2537 = vld [vmem:[%s2536] sm:$0xf]
    %v2538 = vld [vmem:[%s2536 + $0x4] sm:$0xf]
    %v2539 = vld [vmem:[%s2536 + $0x8] sm:$0xf]
    %v2540 = vld [vmem:[%s2536 + $0xc] sm:$0xf]
    %v2545 = vunpack.c.l.b16 %v2537
    %v2546 = vunpack.c.l.b16 %v2538
    %v2547 = vunpack.c.l.b16 %v2539
    %v2548 = vunpack.c.l.b16 %v2540
    %v2549 = vpack.c.b16 %v2546, %v2545
    %v2550 = vpack.c.b16 %v2548, %v2547
    %v2554 = vsel %vm699, %v2365, 0
    %v2557 = vsel %vm699, %v2366, 0
    %v2560 = vsel %vm699, %v2367, 0
    %2562 = vmatprep.subr.bf16.mxu0 0
    %2563 = vmatpush1.bf16.msra.mxu0 %v2549
    %2564 = vmatprep.subr.bf16.mxu0 0
    %2565 = vmatpush1.bf16.msra.mxu0 %v2550
    %2566 = vmatprep.subr.bf16.mxu0 0
    %2567 = vmatpush1.bf16.msra.mxu0 0
    %2568 = vmatprep.subr.bf16.mxu0 0
    %2569 = vmatpush1.bf16.msra.mxu0 0
    %2570 = vmatprep.subr.bf16.mxu0 0
    %2571 = vmatpush1.bf16.msra.mxu0 0
    %2572 = vmatprep.subr.bf16.mxu0 0
    %2573 = vmatpush1.bf16.msra.mxu0 0
    %2574 = vmatprep.subr.bf16.mxu0 0
    %2575 = vmatpush1.bf16.msra.mxu0 0
    %2576 = vmatprep.subr.bf16.mxu0 0
    %2577 = vmatpush1.bf16.msra.mxu0 0
    %2578 = vmatprep.subr.bf16.mxu0 0
    %2579 = vmatpush1.bf16.msra.mxu0 0
    %2580 = vmatprep.subr.bf16.mxu0 0
    %2581 = vmatpush1.bf16.msra.mxu0 0
    %2582 = vmatprep.subr.bf16.mxu0 0
    %2583 = vmatpush1.bf16.msra.mxu0 0
    %2584 = vmatprep.subr.bf16.mxu0 0
    %2585 = vmatpush1.bf16.msra.mxu0 0
    %2586 = vmatprep.subr.bf16.mxu0 0
    %2587 = vmatpush1.bf16.msra.mxu0 0
    %2588 = vmatprep.subr.bf16.mxu0 0
    %2589 = vmatpush1.bf16.msra.mxu0 0
    %2590 = vmatprep.subr.bf16.mxu0 0
    %2591 = vmatpush1.bf16.msra.mxu0 0
    %2592 = vmatprep.subr.bf16.mxu0 0
    %2593 = vmatpush1.bf16.msra.mxu0 0
    %2594 = vmatprep.mubr.bf16.mxu0 0
    %2595 = vmatmul.mubr.bf16.gmra.mrb[0].mxu0 %v2554
    %v2596 = vpop.f32.mrb[0].mxu0
    %v2597 = vadd.f32 0.0, %v2596
    %v2598 = vpop.f32.mrb[0].mxu0
    %v2599 = vpop.f32.mrb[0].mxu0
    %v2600 = vadd.f32 0.0, %v2599
    %v2601 = vpop.f32.mrb[0].mxu0
    %2602 = vmatprep.mubr.bf16.mxu0 0
    %2603 = vmatmul.mubr.bf16.gmra.mrb[0].mxu0 %v2557
    %v2604 = vpop.f32.mrb[0].mxu0
    %v2605 = vadd.f32 0.0, %v2604
    %v2606 = vpop.f32.mrb[0].mxu0
    %v2607 = vpop.f32.mrb[0].mxu0
    %v2608 = vadd.f32 0.0, %v2607
    %v2609 = vpop.f32.mrb[0].mxu0
    %2610 = vmatprep.mubr.bf16.mxu0 0
    %2611 = vmatmul.mubr.bf16.gmra.mrb[0].mxu0 %v2560
    %v2612 = vpop.f32.mrb[0].mxu0
    %v2613 = vadd.f32 0.0, %v2612
    %v2614 = vpop.f32.mrb[0].mxu0
    %v2615 = vpop.f32.mrb[0].mxu0
    %v2616 = vadd.f32 0.0, %v2615
    %v2617 = vpop.f32.mrb[0].mxu0
    %2618 = vdwg.mxu0
    %v2619 = vadd.f32 %v2514, %v2597
    %v2620 = vadd.f32 %v2517, %v2600
    %v2621 = vadd.f32 %v2522, %v2605
    %v2622 = vadd.f32 %v2525, %v2608
    %v2623 = vadd.f32 %v2530, %v2613
    %v2624 = vadd.f32 %v2533, %v2616
    %s2625 = scalar_lea.vmem %s10, 48
    %v2626 = vld [vmem:[%s2625] sm:$0xf]
    %v2627 = vld [vmem:[%s2625 + $0x4] sm:$0xf]
    %v2628 = vld [vmem:[%s2625 + $0x8] sm:$0xf]
    %v2629 = vld [vmem:[%s2625 + $0xc] sm:$0xf]
    %v2634 = vunpack.c.l.b16 %v2626
    %v2635 = vunpack.c.l.b16 %v2627
    %v2636 = vunpack.c.l.b16 %v2628
    %v2637 = vunpack.c.l.b16 %v2629
    %v2638 = vpack.c.b16 %v2635, %v2634
    %v2639 = vpack.c.b16 %v2637, %v2636
    %v2643 = vsel %vm699, %v2368, 0
    %v2646 = vsel %vm699, %v2369, 0
    %v2649 = vsel %vm699, %v2370, 0
    %2651 = vmatprep.subr.bf16.mxu0 0
    %2652 = vmatpush1.bf16.msra.mxu0 %v2638
    %2653 = vmatprep.subr.bf16.mxu0 0
    %2654 = vmatpush1.bf16.msra.mxu0 %v2639
    %2655 = vmatprep.subr.bf16.mxu0 0
    %2656 = vmatpush1.bf16.msra.mxu0 0
    %2657 = vmatprep.subr.bf16.mxu0 0
    %2658 = vmatpush1.bf16.msra.mxu0 0
    %2659 = vmatprep.subr.bf16.mxu0 0
    %2660 = vmatpush1.bf16.msra.mxu0 0
    %2661 = vmatprep.subr.bf16.mxu0 0
    %2662 = vmatpush1.bf16.msra.mxu0 0
    %2663 = vmatprep.subr.bf16.mxu0 0
    %2664 = vmatpush1.bf16.msra.mxu0 0
    %2665 = vmatprep.subr.bf16.mxu0 0
    %2666 = vmatpush1.bf16.msra.mxu0 0
    %2667 = vmatprep.subr.bf16.mxu0 0
    %2668 = vmatpush1.bf16.msra.mxu0 0
    %2669 = vmatprep.subr.bf16.mxu0 0
    %2670 = vmatpush1.bf16.msra.mxu0 0
    %2671 = vmatprep.subr.bf16.mxu0 0
    %2672 = vmatpush1.bf16.msra.mxu0 0
    %2673 = vmatprep.subr.bf16.mxu0 0
    %2674 = vmatpush1.bf16.msra.mxu0 0
    %2675 = vmatprep.subr.bf16.mxu0 0
    %2676 = vmatpush1.bf16.msra.mxu0 0
    %2677 = vmatprep.subr.bf16.mxu0 0
    %2678 = vmatpush1.bf16.msra.mxu0 0
    %2679 = vmatprep.subr.bf16.mxu0 0
    %2680 = vmatpush1.bf16.msra.mxu0 0
    %2681 = vmatprep.subr.bf16.mxu0 0
    %2682 = vmatpush1.bf16.msra.mxu0 0
    %2683 = vmatprep.mubr.bf16.mxu0 0
    %2684 = vmatmul.mubr.bf16.gmra.mrb[0].mxu0 %v2643
    %v2685 = vpop.f32.mrb[0].mxu0
    %v2686 = vadd.f32 0.0, %v2685
    %v2687 = vpop.f32.mrb[0].mxu0
    %v2688 = vpop.f32.mrb[0].mxu0
    %v2689 = vadd.f32 0.0, %v2688
    %v2690 = vpop.f32.mrb[0].mxu0
    %2691 = vmatprep.mubr.bf16.mxu0 0
    %2692 = vmatmul.mubr.bf16.gmra.mrb[0].mxu0 %v2646
    %v2693 = vpop.f32.mrb[0].mxu0
    %v2694 = vadd.f32 0.0, %v2693
    %v2695 = vpop.f32.mrb[0].mxu0
    %v2696 = vpop.f32.mrb[0].mxu0
    %v2697 = vadd.f32 0.0, %v2696
    %v2698 = vpop.f32.mrb[0].mxu0
    %2699 = vmatprep.mubr.bf16.mxu0 0
    %2700 = vmatmul.mubr.bf16.gmra.mrb[0].mxu0 %v2649
    %v2701 = vpop.f32.mrb[0].mxu0
    %v2702 = vadd.f32 0.0, %v2701
    %v2703 = vpop.f32.mrb[0].mxu0
    %v2704 = vpop.f32.mrb[0].mxu0
    %v2705 = vadd.f32 0.0, %v2704
    %v2706 = vpop.f32.mrb[0].mxu0
    %2707 = vdwg.mxu0
    %v2708 = vadd.f32 %v2619, %v2686
    %v2709 = vadd.f32 %v2620, %v2689
    %v2710 = vadd.f32 %v2621, %v2694
    %v2711 = vadd.f32 %v2622, %v2697
    %v2712 = vadd.f32 %v2623, %v2702
    %v2713 = vadd.f32 %v2624, %v2705
    %v2714 = vld [vmem:[%s11] sm:$0x1]
    %v2716 = vlaneseq
    %v2717 = vshrl.u32 %v2716, 7
    %v2718 = vsub.s32 0, %v2717
    %v2719 = vrot.slane %v2714, %v2718
    %v2721 = vadd.f32 %v2708, %v2719
    %v2722 = vadd.f32 %v2709, %v2719
    %v2723 = vadd.f32 %v2710, %v2719
    %v2724 = vadd.f32 %v2711, %v2719
    %v2725 = vadd.f32 %v2712, %v2719
    %v2726 = vadd.f32 %v2713, %v2719
    %vm2727 = vcmp.ge.f32.partialorder %v2721, 0.0
    %vm2728 = vcmp.ge.f32.partialorder %v2722, 0.0
    %vm2729 = vcmp.ge.f32.partialorder %v2723, 0.0
    %vm2730 = vcmp.ge.f32.partialorder %v2724, 0.0
    %vm2731 = vcmp.ge.f32.partialorder %v2725, 0.0
    %vm2732 = vcmp.ge.f32.partialorder %v2726, 0.0
    %v2733 = vstv %s59
    %v2734 = vmul.f32 %v2733, %v2721
    %v2735 = vmul.f32 %v2733, %v2722
    %v2736 = vmul.f32 %v2733, %v2723
    %v2737 = vmul.f32 %v2733, %v2724
    %v2738 = vmul.f32 %v2733, %v2725
    %v2739 = vmul.f32 %v2733, %v2726
    %v2740 = vsel %vm2727, %v2721, %v2734
    %v2741 = vsel %vm2728, %v2722, %v2735
    %v2742 = vsel %vm2729, %v2723, %v2736
    %v2743 = vsel %vm2730, %v2724, %v2737
    %v2744 = vsel %vm2731, %v2725, %v2738
    %v2745 = vsel %vm2732, %v2726, %v2739
    %vm2746 = vcmask 130048
    %2747 = vst.msk [vmem:[%s12] sm:$0xff] %vm2746, %v2740
    %2748 = vst.msk [vmem:[%s12 + $0x8] sm:$0xff] %vm2746, %v2741
    %2749 = vst.msk [vmem:[%s12 + $0x10] sm:$0xff] %vm2746, %v2742
    %2750 = vst.msk [vmem:[%s12 + $0x18] sm:$0xff] %vm2746, %v2743
    %2751 = vst.msk [vmem:[%s12 + $0x20] sm:$0xff] %vm2746, %v2744
    %2752 = vst.msk [vmem:[%s12 + $0x28] sm:$0xff] %vm2746, %v2745
    // Predicated region
    $region54: #{tpu_custom_call.1} parent=1 // pred_check
      _
    $region55: #{tpu_custom_call.1} parent=1 // pred_check_branch
      %2754 = sbr.rel (0) target = $region57
    $region56: #{tpu_custom_call.1} parent=1 // pred_region
      _
    $region57: #{tpu_custom_call.1} parent=1 // pred_fallthru
      _
    // Predicated region
    $region58: #{tpu_custom_call.1} parent=1 // pred_check
      _
    $region59: #{tpu_custom_call.1} parent=1 // pred_check_branch
      %2756 = sbr.rel (0) target = $region61
    $region60: #{tpu_custom_call.1} parent=1 // pred_region
      _
    $region61: #{tpu_custom_call.1} parent=1 // pred_fallthru
      _
    %2757 = vsyncpa [#allocation3], 1

</llo_original>
